<compile_context>
chip_gen: v7x
topology: tpu7x:2x2x1
jax: 0.10.0
libtpu: 0.0.40
codegen_flags: <defaults>
</compile_context>

<pallas_src>
import functools

import jax
import jax.numpy as jnp
from jax.experimental import pallas as pl
from jax.experimental.pallas import tpu as pltpu

_LANE = 128


def _round_up(x, m):
    return ((x + m - 1) // m) * m


# ---------------------------------------------------------------------------
# Fused kernel body: encoder MLP -> decoder MLP, latent kept on-chip.
# ---------------------------------------------------------------------------
def _mlp_block(h_a, h_b, params, n_relu):
    """One MLP.  First layer uses a split weight (two operands, no concat),
    then (n_relu - 1) x [Linear + ReLU], then a final Linear.  All matmuls
    accumulate in f32 on the MXU; elementwise (bias/ReLU) stays f32 on VPU."""
    w0a, w0b, b0 = params[0][...], params[1][...], params[2][...]
    h = (jnp.dot(h_a.astype(w0a.dtype), w0a, preferred_element_type=jnp.float32)
         + jnp.dot(h_b.astype(w0b.dtype), w0b, preferred_element_type=jnp.float32)
         + b0)
    h = jnp.maximum(h, 0.0)
    idx = 3
    for _ in range(n_relu - 1):
        w, b = params[idx][...], params[idx + 1][...]
        h = jnp.maximum(
            jnp.dot(h.astype(w.dtype), w, preferred_element_type=jnp.float32) + b,
            0.0)
        idx += 2
    wf, bf = params[idx][...], params[idx + 1][...]
    return jnp.dot(h.astype(wf.dtype), wf, preferred_element_type=jnp.float32) + bf


def _cinn_kernel(n_relu, n_params_per_mlp, *refs):
    # refs = (x_ref, c_ref, *enc_params, *dec_params, out_ref)
    x_ref, c_ref = refs[0], refs[1]
    out_ref = refs[-1]
    enc = refs[2:2 + n_params_per_mlp]
    dec = refs[2 + n_params_per_mlp:2 + 2 * n_params_per_mlp]

    x = x_ref[...].astype(jnp.float32)
    c = c_ref[...].astype(jnp.float32)

    # Encoder: (TB, dx)+(TB, dc) -> (TB, O_pad); latent stays on-chip (vregs/VMEM).
    latent = _mlp_block(x, c, enc, n_relu)
    # Decoder: (TB, O_pad)+(TB, dc) -> (TB, O_pad).  Padded lanes of `latent`
    # are zero AND the matching decoder-weight rows are zero, so no masking.
    out = _mlp_block(latent, c, dec, n_relu)
    out_ref[...] = out.astype(out_ref.dtype)


# ---------------------------------------------------------------------------
# Parameter preparation (done once): split first-layer weight, pad to 128 lanes.
# ---------------------------------------------------------------------------
def _prep_params(ws, bs, *, d_a, d_a_pad, d_b, h_pad, o_pad, w_dtype):
    def pad_w(w, rows, cols):
        out = jnp.zeros((rows, cols), jnp.float32)
        return out.at[:w.shape[0], :w.shape[1]].set(w).astype(w_dtype)

    def pad_b(b, cols):
        # Biases stay f32 so the elementwise VPU path stays f32 (v5e has no
        # bf16 VALU anyway).
        return jnp.zeros((1, cols), jnp.float32).at[0, :b.shape[0]].set(b)

    params = [
        pad_w(ws[0][:d_a], d_a_pad, h_pad),   # first-layer weight, operand A (x / latent)
        pad_w(ws[0][d_a:], d_b, h_pad),       # first-layer weight, operand B (= c)
        pad_b(bs[0], h_pad),
    ]
    for w, b in zip(ws[1:-1], bs[1:-1]):
        params += [pad_w(w, h_pad, h_pad), pad_b(b, h_pad)]
    params += [pad_w(ws[-1], h_pad, o_pad), pad_b(bs[-1], o_pad)]
    return params


def _mlp_weights(params):
    # params = [w0a, w0b, b0, w1, b1, ..., wf, bf] -> weight tensors only.
    ws = [params[0], params[1]]
    for i in range(3, len(params), 2):
        ws.append(params[i])
    return ws


# ---------------------------------------------------------------------------
# Fused forward wrapper
# ---------------------------------------------------------------------------
def cinn_forward(x, c, enc_params, dec_params, *, n_relu, out_size, out_pad,
                 batch_tile=128):
    B, d_x = x.shape
    d_c = c.shape[1]

    # Batch tiling: multiples of 8 sublanes; pad the batch to a full tile.
    tb = min(batch_tile, _round_up(B, 8))
    b_pad = _round_up(B, tb)
    if b_pad != B:
        x = jnp.pad(x, ((0, b_pad - B), (0, 0)))
        c = jnp.pad(c, ((0, b_pad - B), (0, 0)))
    x = x.astype(jnp.float32)
    c = c.astype(jnp.float32)

    all_params = list(enc_params) + list(dec_params)
    n_params = len(enc_params)
    kernel = functools.partial(_cinn_kernel, n_relu, n_params)

    def resident(shape):
        nd = len(shape)
        # Constant index_map -> block never changes -> weights stay in VMEM
        # across batch tiles (fetched once).
        return pl.BlockSpec(shape, lambda i: (0,) * nd)

    in_specs = [
        pl.BlockSpec((tb, d_x), lambda i: (i, 0)),
        pl.BlockSpec((tb, d_c), lambda i: (i, 0)),
    ]
    in_specs += [resident(p.shape) for p in all_params]
    out_spec = pl.BlockSpec((tb, out_pad), lambda i: (i, 0))

    # VMEM budget: resident params (x2 safety for buffering) + double-buffered
    # activation tiles + slack; clamp into [16 MiB, 64 MiB].
    param_bytes = sum(int(p.size) * p.dtype.itemsize for p in all_params)
    act_bytes = 2 * 2 * tb * (d_x + d_c + out_pad) * 4
    vmem_limit = min(64 << 20,
                     max(16 << 20, 2 * param_bytes + act_bytes + (4 << 20)))

    flops = 2 * b_pad * sum(
        int(w.shape[0]) * int(w.shape[1])
        for w in (_mlp_weights(list(enc_params)) + _mlp_weights(list(dec_params))))
    bytes_accessed = (param_bytes
                      + b_pad * (d_x + d_c) * 4
                      + b_pad * out_pad * 4)

    out = pl.pallas_call(
        kernel,
        out_shape=jax.ShapeDtypeStruct((b_pad, out_pad), jnp.float32),
        grid=(b_pad // tb,),
        in_specs=in_specs,
        out_specs=out_spec,
        compiler_params=pltpu.CompilerParams(
            dimension_semantics=("parallel",),
            vmem_limit_bytes=int(vmem_limit)),
        cost_estimate=pl.CostEstimate(
            flops=int(flops), transcendentals=0,
            bytes_accessed=int(bytes_accessed)),
    )(x, c, *all_params)

    return out[:B, :out_size]


# ---------------------------------------------------------------------------
# CINN module (deterministic init mimicking torch.nn.Linear defaults)
# ---------------------------------------------------------------------------
def _init_linear(key, fan_in, fan_out):
    kw, kb = jax.random.split(key)
    bound = 1.0 / jnp.sqrt(jnp.float32(fan_in))
    w = jax.random.uniform(kw, (fan_in, fan_out), jnp.float32, -bound, bound)
    b = jax.random.uniform(kb, (fan_out,), jnp.float32, -bound, bound)
    return w, b


def _init_mlp(key, in_dim, hidden, num_layers, out_dim):
    # Matches the PyTorch Sequential: Linear+ReLU, (num_layers-1) x
    # [Linear+ReLU], final Linear.
    dims = [in_dim] + [hidden] * num_layers + [out_dim]
    keys = jax.random.split(key, len(dims) - 1)
    ws, bs = [], []
    for k, di, do in zip(keys, dims[:-1], dims[1:]):
        w, b = _init_linear(k, di, do)
        ws.append(w)
        bs.append(b)
    return ws, bs


class CINNPallas:
    def __init__(self, input_size, condition_size, hidden_size, num_layers,
                 output_size, key, param_dtype=jnp.float32, batch_tile=128):
        self.input_size = input_size
        self.condition_size = condition_size
        self.hidden_size = hidden_size
        self.num_layers = num_layers
        self.output_size = output_size
        self.batch_tile = batch_tile

        self.h_pad = _round_up(hidden_size, _LANE)
        self.o_pad = _round_up(output_size, _LANE)

        k_enc, k_dec = jax.random.split(key)
        # Raw (unpadded) params, also used by the pure-JAX reference.
        self.enc_w, self.enc_b = _init_mlp(
            k_enc, input_size + condition_size, hidden_size, num_layers, output_size)
        self.dec_w, self.dec_b = _init_mlp(
            k_dec, output_size + condition_size, hidden_size, num_layers, output_size)

        # Split first-layer weights and pad all feature dims to 128 lanes (once).
        self.enc_params = _prep_params(
            self.enc_w, self.enc_b, d_a=input_size, d_a_pad=input_size,
            d_b=condition_size, h_pad=self.h_pad, o_pad=self.o_pad,
            w_dtype=param_dtype)
        self.dec_params = _prep_params(
            self.dec_w, self.dec_b, d_a=output_size, d_a_pad=self.o_pad,
            d_b=condition_size, h_pad=self.h_pad, o_pad=self.o_pad,
            w_dtype=param_dtype)

    def __call__(self, x, c):
        return cinn_forward(
            x, c, self.enc_params, self.dec_params,
            n_relu=self.num_layers, out_size=self.output_size,
            out_pad=self.o_pad, batch_tile=self.batch_tile)


# ---------------------------------------------------------------------------
# Pure-JAX reference (for correctness check)
# ---------------------------------------------------------------------------
def _mlp_ref(x, ws, bs):
    h = x
    for w, b in zip(ws[:-1], bs[:-1]):
        h = jnp.maximum(h @ w + b, 0.0)
    return h @ ws[-1] + bs[-1]


def _cinn_ref(model, x, c):
    latent = _mlp_ref(jnp.concatenate([x, c], axis=1), model.enc_w, model.enc_b)
    return _mlp_ref(jnp.concatenate([latent, c], axis=1), model.dec_w, model.dec_b)


# ---------------------------------------------------------------------------
if __name__ == "__main__":
    key = jax.random.PRNGKey(0)
    k_params, k_x, k_c = jax.random.split(key, 3)

    batch = 8
    input_size = 6
    condition_size = 2
    hidden_size = 32
    num_layers = 3
    output_size = 4

    model = CINNPallas(input_size, condition_size, hidden_size, num_layers,
                       output_size, k_params)

    x = jax.random.normal(k_x, (batch, input_size), jnp.float32)
    c = jax.random.normal(k_c, (batch, condition_size), jnp.float32)

    out = jax.block_until_ready(model(x, c))

    ref = _cinn_ref(model, x, c)
    assert out.shape == (batch, output_size)
    assert jnp.allclose(out, ref, atol=1e-5, rtol=1e-5), \
        float(jnp.max(jnp.abs(out - ref)))

    print("KERNEL_OK")
</pallas_src>

<mosaic_0001>
module attributes {stable_mosaic.version = 11 : i64} {
  func.func @_cinn_kernel(%arg0: i32, %arg1: memref<8x6xf32, #tpu.memory_space<vmem>>, %arg2: memref<8x2xf32, #tpu.memory_space<vmem>>, %arg3: memref<6x128xf32, #tpu.memory_space<vmem>>, %arg4: memref<2x128xf32, #tpu.memory_space<vmem>>, %arg5: memref<1x128xf32, #tpu.memory_space<vmem>>, %arg6: memref<128x128xf32, #tpu.memory_space<vmem>>, %arg7: memref<1x128xf32, #tpu.memory_space<vmem>>, %arg8: memref<128x128xf32, #tpu.memory_space<vmem>>, %arg9: memref<1x128xf32, #tpu.memory_space<vmem>>, %arg10: memref<128x128xf32, #tpu.memory_space<vmem>>, %arg11: memref<1x128xf32, #tpu.memory_space<vmem>>, %arg12: memref<128x128xf32, #tpu.memory_space<vmem>>, %arg13: memref<2x128xf32, #tpu.memory_space<vmem>>, %arg14: memref<1x128xf32, #tpu.memory_space<vmem>>, %arg15: memref<128x128xf32, #tpu.memory_space<vmem>>, %arg16: memref<1x128xf32, #tpu.memory_space<vmem>>, %arg17: memref<128x128xf32, #tpu.memory_space<vmem>>, %arg18: memref<1x128xf32, #tpu.memory_space<vmem>>, %arg19: memref<128x128xf32, #tpu.memory_space<vmem>>, %arg20: memref<1x128xf32, #tpu.memory_space<vmem>>, %arg21: memref<8x128xf32, #tpu.memory_space<vmem>>) attributes {dimension_semantics = [#tpu.dimension_semantics<parallel>], iteration_bounds = array<i64: 1>, scalar_prefetch = 0 : i64, scratch_operands = 0 : i64, tpu.core_type = #tpu.core_type<tc>, window_params = [{transform_indices = @transform_0, window_bounds = array<i64: 8, 6>}, {transform_indices = @transform_1, window_bounds = array<i64: 8, 2>}, {pipeline_mode = #tpu.pipeline_mode<synchronous>, transform_indices = @transform_2, window_bounds = array<i64: 6, 128>}, {pipeline_mode = #tpu.pipeline_mode<synchronous>, transform_indices = @transform_3, window_bounds = array<i64: 2, 128>}, {pipeline_mode = #tpu.pipeline_mode<synchronous>, transform_indices = @transform_4, window_bounds = array<i64: 1, 128>}, {pipeline_mode = #tpu.pipeline_mode<synchronous>, transform_indices = @transform_5, window_bounds = array<i64: 128, 128>}, {pipeline_mode = #tpu.pipeline_mode<synchronous>, transform_indices = @transform_6, window_bounds = array<i64: 1, 128>}, {pipeline_mode = #tpu.pipeline_mode<synchronous>, transform_indices = @transform_7, window_bounds = array<i64: 128, 128>}, {pipeline_mode = #tpu.pipeline_mode<synchronous>, transform_indices = @transform_8, window_bounds = array<i64: 1, 128>}, {pipeline_mode = #tpu.pipeline_mode<synchronous>, transform_indices = @transform_9, window_bounds = array<i64: 128, 128>}, {pipeline_mode = #tpu.pipeline_mode<synchronous>, transform_indices = @transform_10, window_bounds = array<i64: 1, 128>}, {pipeline_mode = #tpu.pipeline_mode<synchronous>, transform_indices = @transform_11, window_bounds = array<i64: 128, 128>}, {pipeline_mode = #tpu.pipeline_mode<synchronous>, transform_indices = @transform_12, window_bounds = array<i64: 2, 128>}, {pipeline_mode = #tpu.pipeline_mode<synchronous>, transform_indices = @transform_13, window_bounds = array<i64: 1, 128>}, {pipeline_mode = #tpu.pipeline_mode<synchronous>, transform_indices = @transform_14, window_bounds = array<i64: 128, 128>}, {pipeline_mode = #tpu.pipeline_mode<synchronous>, transform_indices = @transform_15, window_bounds = array<i64: 1, 128>}, {pipeline_mode = #tpu.pipeline_mode<synchronous>, transform_indices = @transform_16, window_bounds = array<i64: 128, 128>}, {pipeline_mode = #tpu.pipeline_mode<synchronous>, transform_indices = @transform_17, window_bounds = array<i64: 1, 128>}, {pipeline_mode = #tpu.pipeline_mode<synchronous>, transform_indices = @transform_18, window_bounds = array<i64: 128, 128>}, {pipeline_mode = #tpu.pipeline_mode<synchronous>, transform_indices = @transform_19, window_bounds = array<i64: 1, 128>}, {transform_indices = @transform_20, window_bounds = array<i64: 8, 128>}]} {
    %c0 = arith.constant 0 : index
    %c0_0 = arith.constant 0 : index
    %0 = vector.load %arg1[%c0, %c0_0] : memref<8x6xf32, #tpu.memory_space<vmem>>, vector<8x6xf32>
    %c0_1 = arith.constant 0 : index
    %c0_2 = arith.constant 0 : index
    %1 = vector.load %arg2[%c0_1, %c0_2] : memref<8x2xf32, #tpu.memory_space<vmem>>, vector<8x2xf32>
    %c0_3 = arith.constant 0 : index
    %c0_4 = arith.constant 0 : index
    %2 = vector.load %arg3[%c0_3, %c0_4] : memref<6x128xf32, #tpu.memory_space<vmem>>, vector<6x128xf32>
    %c0_5 = arith.constant 0 : index
    %c0_6 = arith.constant 0 : index
    %3 = vector.load %arg4[%c0_5, %c0_6] : memref<2x128xf32, #tpu.memory_space<vmem>>, vector<2x128xf32>
    %c0_7 = arith.constant 0 : index
    %c0_8 = arith.constant 0 : index
    %4 = vector.load %arg5[%c0_7, %c0_8] : memref<1x128xf32, #tpu.memory_space<vmem>>, vector<1x128xf32>
    %cst = arith.constant dense<0.000000e+00> : vector<8x128xf32>
    %5 = tpu.matmul %0, %2, %cst {dimension_numbers = #tpu.dot_dimension_numbers<[1], [0], [0], [1], [0, 0, 1, 1], [], []>} : vector<8x6xf32>, vector<6x128xf32>, vector<8x128xf32> -> vector<8x128xf32>
    %cst_9 = arith.constant dense<0.000000e+00> : vector<8x128xf32>
    %6 = tpu.matmul %1, %3, %cst_9 {dimension_numbers = #tpu.dot_dimension_numbers<[1], [0], [0], [1], [0, 0, 1, 1], [], []>} : vector<8x2xf32>, vector<2x128xf32>, vector<8x128xf32> -> vector<8x128xf32>
    %7 = arith.addf %5, %6 : vector<8x128xf32>
    %8 = vector.broadcast %4 : vector<1x128xf32> to vector<8x128xf32>
    %9 = arith.addf %7, %8 : vector<8x128xf32>
    %cst_10 = arith.constant 0.000000e+00 : f32
    %10 = vector.broadcast %cst_10 : f32 to vector<8x128xf32>
    %11 = arith.maximumf %9, %10 : vector<8x128xf32>
    %c0_11 = arith.constant 0 : index
    %c0_12 = arith.constant 0 : index
    %12 = vector.load %arg6[%c0_11, %c0_12] : memref<128x128xf32, #tpu.memory_space<vmem>>, vector<128x128xf32>
    %c0_13 = arith.constant 0 : index
    %c0_14 = arith.constant 0 : index
    %13 = vector.load %arg7[%c0_13, %c0_14] : memref<1x128xf32, #tpu.memory_space<vmem>>, vector<1x128xf32>
    %cst_15 = arith.constant dense<0.000000e+00> : vector<8x128xf32>
    %14 = tpu.matmul %11, %12, %cst_15 {dimension_numbers = #tpu.dot_dimension_numbers<[1], [0], [0], [1], [0, 0, 1, 1], [], []>} : vector<8x128xf32>, vector<128x128xf32>, vector<8x128xf32> -> vector<8x128xf32>
    %15 = vector.broadcast %13 : vector<1x128xf32> to vector<8x128xf32>
    %16 = arith.addf %14, %15 : vector<8x128xf32>
    %cst_16 = arith.constant 0.000000e+00 : f32
    %17 = vector.broadcast %cst_16 : f32 to vector<8x128xf32>
    %18 = arith.maximumf %16, %17 : vector<8x128xf32>
    %c0_17 = arith.constant 0 : index
    %c0_18 = arith.constant 0 : index
    %19 = vector.load %arg8[%c0_17, %c0_18] : memref<128x128xf32, #tpu.memory_space<vmem>>, vector<128x128xf32>
    %c0_19 = arith.constant 0 : index
    %c0_20 = arith.constant 0 : index
    %20 = vector.load %arg9[%c0_19, %c0_20] : memref<1x128xf32, #tpu.memory_space<vmem>>, vector<1x128xf32>
    %cst_21 = arith.constant dense<0.000000e+00> : vector<8x128xf32>
    %21 = tpu.matmul %18, %19, %cst_21 {dimension_numbers = #tpu.dot_dimension_numbers<[1], [0], [0], [1], [0, 0, 1, 1], [], []>} : vector<8x128xf32>, vector<128x128xf32>, vector<8x128xf32> -> vector<8x128xf32>
    %22 = vector.broadcast %20 : vector<1x128xf32> to vector<8x128xf32>
    %23 = arith.addf %21, %22 : vector<8x128xf32>
    %cst_22 = arith.constant 0.000000e+00 : f32
    %24 = vector.broadcast %cst_22 : f32 to vector<8x128xf32>
    %25 = arith.maximumf %23, %24 : vector<8x128xf32>
    %c0_23 = arith.constant 0 : index
    %c0_24 = arith.constant 0 : index
    %26 = vector.load %arg10[%c0_23, %c0_24] : memref<128x128xf32, #tpu.memory_space<vmem>>, vector<128x128xf32>
    %c0_25 = arith.constant 0 : index
    %c0_26 = arith.constant 0 : index
    %27 = vector.load %arg11[%c0_25, %c0_26] : memref<1x128xf32, #tpu.memory_space<vmem>>, vector<1x128xf32>
    %cst_27 = arith.constant dense<0.000000e+00> : vector<8x128xf32>
    %28 = tpu.matmul %25, %26, %cst_27 {dimension_numbers = #tpu.dot_dimension_numbers<[1], [0], [0], [1], [0, 0, 1, 1], [], []>} : vector<8x128xf32>, vector<128x128xf32>, vector<8x128xf32> -> vector<8x128xf32>
    %29 = vector.broadcast %27 : vector<1x128xf32> to vector<8x128xf32>
    %30 = arith.addf %28, %29 : vector<8x128xf32>
    %c0_28 = arith.constant 0 : index
    %c0_29 = arith.constant 0 : index
    %31 = vector.load %arg12[%c0_28, %c0_29] : memref<128x128xf32, #tpu.memory_space<vmem>>, vector<128x128xf32>
    %c0_30 = arith.constant 0 : index
    %c0_31 = arith.constant 0 : index
    %32 = vector.load %arg13[%c0_30, %c0_31] : memref<2x128xf32, #tpu.memory_space<vmem>>, vector<2x128xf32>
    %c0_32 = arith.constant 0 : index
    %c0_33 = arith.constant 0 : index
    %33 = vector.load %arg14[%c0_32, %c0_33] : memref<1x128xf32, #tpu.memory_space<vmem>>, vector<1x128xf32>
    %cst_34 = arith.constant dense<0.000000e+00> : vector<8x128xf32>
    %34 = tpu.matmul %30, %31, %cst_34 {dimension_numbers = #tpu.dot_dimension_numbers<[1], [0], [0], [1], [0, 0, 1, 1], [], []>} : vector<8x128xf32>, vector<128x128xf32>, vector<8x128xf32> -> vector<8x128xf32>
    %cst_35 = arith.constant dense<0.000000e+00> : vector<8x128xf32>
    %35 = tpu.matmul %1, %32, %cst_35 {dimension_numbers = #tpu.dot_dimension_numbers<[1], [0], [0], [1], [0, 0, 1, 1], [], []>} : vector<8x2xf32>, vector<2x128xf32>, vector<8x128xf32> -> vector<8x128xf32>
    %36 = arith.addf %34, %35 : vector<8x128xf32>
    %37 = vector.broadcast %33 : vector<1x128xf32> to vector<8x128xf32>
    %38 = arith.addf %36, %37 : vector<8x128xf32>
    %cst_36 = arith.constant 0.000000e+00 : f32
    %39 = vector.broadcast %cst_36 : f32 to vector<8x128xf32>
    %40 = arith.maximumf %38, %39 : vector<8x128xf32>
    %c0_37 = arith.constant 0 : index
    %c0_38 = arith.constant 0 : index
    %41 = vector.load %arg15[%c0_37, %c0_38] : memref<128x128xf32, #tpu.memory_space<vmem>>, vector<128x128xf32>
    %c0_39 = arith.constant 0 : index
    %c0_40 = arith.constant 0 : index
    %42 = vector.load %arg16[%c0_39, %c0_40] : memref<1x128xf32, #tpu.memory_space<vmem>>, vector<1x128xf32>
    %cst_41 = arith.constant dense<0.000000e+00> : vector<8x128xf32>
    %43 = tpu.matmul %40, %41, %cst_41 {dimension_numbers = #tpu.dot_dimension_numbers<[1], [0], [0], [1], [0, 0, 1, 1], [], []>} : vector<8x128xf32>, vector<128x128xf32>, vector<8x128xf32> -> vector<8x128xf32>
    %44 = vector.broadcast %42 : vector<1x128xf32> to vector<8x128xf32>
    %45 = arith.addf %43, %44 : vector<8x128xf32>
    %cst_42 = arith.constant 0.000000e+00 : f32
    %46 = vector.broadcast %cst_42 : f32 to vector<8x128xf32>
    %47 = arith.maximumf %45, %46 : vector<8x128xf32>
    %c0_43 = arith.constant 0 : index
    %c0_44 = arith.constant 0 : index
    %48 = vector.load %arg17[%c0_43, %c0_44] : memref<128x128xf32, #tpu.memory_space<vmem>>, vector<128x128xf32>
    %c0_45 = arith.constant 0 : index
    %c0_46 = arith.constant 0 : index
    %49 = vector.load %arg18[%c0_45, %c0_46] : memref<1x128xf32, #tpu.memory_space<vmem>>, vector<1x128xf32>
    %cst_47 = arith.constant dense<0.000000e+00> : vector<8x128xf32>
    %50 = tpu.matmul %47, %48, %cst_47 {dimension_numbers = #tpu.dot_dimension_numbers<[1], [0], [0], [1], [0, 0, 1, 1], [], []>} : vector<8x128xf32>, vector<128x128xf32>, vector<8x128xf32> -> vector<8x128xf32>
    %51 = vector.broadcast %49 : vector<1x128xf32> to vector<8x128xf32>
    %52 = arith.addf %50, %51 : vector<8x128xf32>
    %cst_48 = arith.constant 0.000000e+00 : f32
    %53 = vector.broadcast %cst_48 : f32 to vector<8x128xf32>
    %54 = arith.maximumf %52, %53 : vector<8x128xf32>
    %c0_49 = arith.constant 0 : index
    %c0_50 = arith.constant 0 : index
    %55 = vector.load %arg19[%c0_49, %c0_50] : memref<128x128xf32, #tpu.memory_space<vmem>>, vector<128x128xf32>
    %c0_51 = arith.constant 0 : index
    %c0_52 = arith.constant 0 : index
    %56 = vector.load %arg20[%c0_51, %c0_52] : memref<1x128xf32, #tpu.memory_space<vmem>>, vector<1x128xf32>
    %cst_53 = arith.constant dense<0.000000e+00> : vector<8x128xf32>
    %57 = tpu.matmul %54, %55, %cst_53 {dimension_numbers = #tpu.dot_dimension_numbers<[1], [0], [0], [1], [0, 0, 1, 1], [], []>} : vector<8x128xf32>, vector<128x128xf32>, vector<8x128xf32> -> vector<8x128xf32>
    %58 = vector.broadcast %56 : vector<1x128xf32> to vector<8x128xf32>
    %59 = arith.addf %57, %58 : vector<8x128xf32>
    %c0_54 = arith.constant 0 : index
    %c0_55 = arith.constant 0 : index
    %60 = vector.load %arg21[%c0_54, %c0_55] : memref<8x128xf32, #tpu.memory_space<vmem>>, vector<8x128xf32>
    tpu.vector_store %arg21[%c0_54, %c0_55], %59 {strides = array<i32>} : memref<8x128xf32, #tpu.memory_space<vmem>>, vector<8x128xf32>,
    return
  }
  func.func @transform_0(%arg0: i32) -> (i32, i32) {
    %c0_i32 = arith.constant 0 : i32
    %c0_i32_0 = arith.constant 0 : i32
    return %arg0, %c0_i32 : i32, i32
  }
  func.func @transform_1(%arg0: i32) -> (i32, i32) {
    %c0_i32 = arith.constant 0 : i32
    %c0_i32_0 = arith.constant 0 : i32
    return %arg0, %c0_i32 : i32, i32
  }
  func.func @transform_2(%arg0: i32) -> (i32, i32) {
    %c0_i32 = arith.constant 0 : i32
    %c0_i32_0 = arith.constant 0 : i32
    %c0_i32_1 = arith.constant 0 : i32
    return %c0_i32, %c0_i32_0 : i32, i32
  }
  func.func @transform_3(%arg0: i32) -> (i32, i32) {
    %c0_i32 = arith.constant 0 : i32
    %c0_i32_0 = arith.constant 0 : i32
    %c0_i32_1 = arith.constant 0 : i32
    return %c0_i32, %c0_i32_0 : i32, i32
  }
  func.func @transform_4(%arg0: i32) -> (i32, i32) {
    %c0_i32 = arith.constant 0 : i32
    %c0_i32_0 = arith.constant 0 : i32
    %c0_i32_1 = arith.constant 0 : i32
    return %c0_i32, %c0_i32_0 : i32, i32
  }
  func.func @transform_5(%arg0: i32) -> (i32, i32) {
    %c0_i32 = arith.constant 0 : i32
    %c0_i32_0 = arith.constant 0 : i32
    %c0_i32_1 = arith.constant 0 : i32
    return %c0_i32, %c0_i32_0 : i32, i32
  }
  func.func @transform_6(%arg0: i32) -> (i32, i32) {
    %c0_i32 = arith.constant 0 : i32
    %c0_i32_0 = arith.constant 0 : i32
    %c0_i32_1 = arith.constant 0 : i32
    return %c0_i32, %c0_i32_0 : i32, i32
  }
  func.func @transform_7(%arg0: i32) -> (i32, i32) {
    %c0_i32 = arith.constant 0 : i32
    %c0_i32_0 = arith.constant 0 : i32
    %c0_i32_1 = arith.constant 0 : i32
    return %c0_i32, %c0_i32_0 : i32, i32
  }
  func.func @transform_8(%arg0: i32) -> (i32, i32) {
    %c0_i32 = arith.constant 0 : i32
    %c0_i32_0 = arith.constant 0 : i32
    %c0_i32_1 = arith.constant 0 : i32
    return %c0_i32, %c0_i32_0 : i32, i32
  }
  func.func @transform_9(%arg0: i32) -> (i32, i32) {
    %c0_i32 = arith.constant 0 : i32
    %c0_i32_0 = arith.constant 0 : i32
    %c0_i32_1 = arith.constant 0 : i32
    return %c0_i32, %c0_i32_0 : i32, i32
  }
  func.func @transform_10(%arg0: i32) -> (i32, i32) {
    %c0_i32 = arith.constant 0 : i32
    %c0_i32_0 = arith.constant 0 : i32
    %c0_i32_1 = arith.constant 0 : i32
    return %c0_i32, %c0_i32_0 : i32, i32
  }
  func.func @transform_11(%arg0: i32) -> (i32, i32) {
    %c0_i32 = arith.constant 0 : i32
    %c0_i32_0 = arith.constant 0 : i32
    %c0_i32_1 = arith.constant 0 : i32
    return %c0_i32, %c0_i32_0 : i32, i32
  }
  func.func @transform_12(%arg0: i32) -> (i32, i32) {
    %c0_i32 = arith.constant 0 : i32
    %c0_i32_0 = arith.constant 0 : i32
    %c0_i32_1 = arith.constant 0 : i32
    return %c0_i32, %c0_i32_0 : i32, i32
  }
  func.func @transform_13(%arg0: i32) -> (i32, i32) {
    %c0_i32 = arith.constant 0 : i32
    %c0_i32_0 = arith.constant 0 : i32
    %c0_i32_1 = arith.constant 0 : i32
    return %c0_i32, %c0_i32_0 : i32, i32
  }
  func.func @transform_14(%arg0: i32) -> (i32, i32) {
    %c0_i32 = arith.constant 0 : i32
    %c0_i32_0 = arith.constant 0 : i32
    %c0_i32_1 = arith.constant 0 : i32
    return %c0_i32, %c0_i32_0 : i32, i32
  }
  func.func @transform_15(%arg0: i32) -> (i32, i32) {
    %c0_i32 = arith.constant 0 : i32
    %c0_i32_0 = arith.constant 0 : i32
    %c0_i32_1 = arith.constant 0 : i32
    return %c0_i32, %c0_i32_0 : i32, i32
  }
  func.func @transform_16(%arg0: i32) -> (i32, i32) {
    %c0_i32 = arith.constant 0 : i32
    %c0_i32_0 = arith.constant 0 : i32
    %c0_i32_1 = arith.constant 0 : i32
    return %c0_i32, %c0_i32_0 : i32, i32
  }
  func.func @transform_17(%arg0: i32) -> (i32, i32) {
    %c0_i32 = arith.constant 0 : i32
    %c0_i32_0 = arith.constant 0 : i32
    %c0_i32_1 = arith.constant 0 : i32
    return %c0_i32, %c0_i32_0 : i32, i32
  }
  func.func @transform_18(%arg0: i32) -> (i32, i32) {
    %c0_i32 = arith.constant 0 : i32
    %c0_i32_0 = arith.constant 0 : i32
    %c0_i32_1 = arith.constant 0 : i32
    return %c0_i32, %c0_i32_0 : i32, i32
  }
  func.func @transform_19(%arg0: i32) -> (i32, i32) {
    %c0_i32 = arith.constant 0 : i32
    %c0_i32_0 = arith.constant 0 : i32
    %c0_i32_1 = arith.constant 0 : i32
    return %c0_i32, %c0_i32_0 : i32, i32
  }
  func.func @transform_20(%arg0: i32) -> (i32, i32) {
    %c0_i32 = arith.constant 0 : i32
    %c0_i32_0 = arith.constant 0 : i32
    return %arg0, %c0_i32 : i32, i32
  }
}

</mosaic_0001>

<llo_original>
// kernel: tpu_custom_call.1
$region0: #{tpu_custom_call.1}
  #allocation0 [shape = 'u32[]', space=smem, size = 0x4, offset = 0x4, fixed_abs, tag = 'smem constant byte address 0x4 - core index']
  #allocation1 [shape = 'u32[144,128]{1,0:T(1,128)}', space=vmem, size = 0x12000, scoped, tag = 'internal scratch']
  %s0 = inlined_call_operand.vmem [shape: f32[8,6], index: 0, kind: input, shape index: {}]
  %s1 = inlined_call_operand.vmem [shape: f32[8,2], index: 1, kind: input, shape index: {}]
  %s2 = inlined_call_operand.vmem [shape: f32[6,128], index: 2, kind: input, shape index: {}]
  %s3 = inlined_call_operand.vmem [shape: f32[2,128], index: 3, kind: input, shape index: {}]
  %s4 = inlined_call_operand.vmem [shape: f32[1,128], index: 4, kind: input, shape index: {}]
  %s5 = inlined_call_operand.hbm [shape: f32[128,128], index: 5, kind: input, shape index: {}]
  %s6 = inlined_call_operand.vmem [shape: f32[1,128], index: 6, kind: input, shape index: {}]
  %s7 = inlined_call_operand.hbm [shape: f32[128,128], index: 7, kind: input, shape index: {}]
  %s8 = inlined_call_operand.vmem [shape: f32[1,128], index: 8, kind: input, shape index: {}]
  %s9 = inlined_call_operand.hbm [shape: f32[128,128], index: 9, kind: input, shape index: {}]
  %s10 = inlined_call_operand.vmem [shape: f32[1,128], index: 10, kind: input, shape index: {}]
  %s11 = inlined_call_operand.hbm [shape: f32[128,128], index: 11, kind: input, shape index: {}]
  %s12 = inlined_call_operand.vmem [shape: f32[2,128], index: 12, kind: input, shape index: {}]
  %s13 = inlined_call_operand.vmem [shape: f32[1,128], index: 13, kind: input, shape index: {}]
  %s14 = inlined_call_operand.hbm [shape: f32[128,128], index: 14, kind: input, shape index: {}]
  %s15 = inlined_call_operand.vmem [shape: f32[1,128], index: 15, kind: input, shape index: {}]
  %s16 = inlined_call_operand.hbm [shape: f32[128,128], index: 16, kind: input, shape index: {}]
  %s17 = inlined_call_operand.vmem [shape: f32[1,128], index: 17, kind: input, shape index: {}]
  %s18 = inlined_call_operand.hbm [shape: f32[128,128], index: 18, kind: input, shape index: {}]
  %s19 = inlined_call_operand.vmem [shape: f32[1,128], index: 19, kind: input, shape index: {}]
  %s20 = inlined_call_operand.hbm [shape: f32[8,128], index: 20, kind: output, shape index: {}]
  %s21 = sld [smem:[#allocation0]]
  $region118: #{tpu_custom_call.1} parent=0
    _
  %s23 = ssub.s32 1, %s21
  %s24 = scalar_select 0, %s23, %s21
  $region1: #{tpu_custom_call.1} parent=0
    #allocation2 [shape = 'u8[65536]{0}', space=vmem, size = 0x10000, scoped, tag = 'input window, operand 5, single buffered']
    #allocation3 [shape = 's32[1]{0}', space=sflag, size = 0x4, scoped, tag = 'scoped memory for tpu_custom_call.1']
    #allocation4 [shape = 's32[1]{0}', space=sflag, size = 0x4, scoped, tag = 'scoped memory for tpu_custom_call.1']
    #allocation5 [shape = 'u8[65536]{0}', space=vmem, size = 0x10000, scoped, tag = 'input window, operand 7, single buffered']
    #allocation6 [shape = 's32[1]{0}', space=sflag, size = 0x4, scoped, tag = 'scoped memory for tpu_custom_call.1']
    #allocation7 [shape = 'u8[65536]{0}', space=vmem, size = 0x10000, scoped, tag = 'input window, operand 9, single buffered']
    #allocation8 [shape = 'u8[65536]{0}', space=vmem, size = 0x10000, scoped, tag = 'input window, operand 11, single buffered']
    #allocation9 [shape = 's32[1]{0}', space=sflag, size = 0x4, scoped, tag = 'scoped memory for tpu_custom_call.1']
    #allocation10 [shape = 'u8[65536]{0}', space=vmem, size = 0x10000, scoped, tag = 'input window, operand 14, single buffered']
    #allocation11 [shape = 'u8[65536]{0}', space=vmem, size = 0x10000, scoped, tag = 'input window, operand 16, single buffered']
    #allocation12 [shape = 's32[1]{0}', space=sflag, size = 0x4, scoped, tag = 'scoped memory for tpu_custom_call.1']
    #allocation13 [shape = 'u8[65536]{0}', space=vmem, size = 0x10000, scoped, tag = 'input window, operand 18, single buffered']
    #allocation14 [shape = 'u8[4096]{0}', space=vmem, size = 0x1000, scoped, tag = 'output window, operand 0, single buffered']
    %25 = vsyncpa [#allocation3], 0
    %26 = vsyncpa [#allocation6], 0
    %27 = vsyncpa [#allocation9], 0
    %28 = vsyncpa [#allocation12], 0
    %29 = vsyncpa [#allocation4], 0
    // Predicated region
    $region2: #{tpu_custom_call.1} parent=1 // pred_check
      _
    $region3: #{tpu_custom_call.1} parent=1 // pred_check_branch
      %31 = sbr.rel (0) target = $region5
    $region4: #{tpu_custom_call.1} parent=1 // pred_region
      _
    $region5: #{tpu_custom_call.1} parent=1 // pred_fallthru
      _
    // Predicated region
    $region6: #{tpu_custom_call.1} parent=1 // pred_check
      _
    $region7: #{tpu_custom_call.1} parent=1 // pred_check_branch
      %33 = sbr.rel (0) target = $region9
    $region8: #{tpu_custom_call.1} parent=1 // pred_region
      _
    $region9: #{tpu_custom_call.1} parent=1 // pred_fallthru
      _
    // Predicated region
    $region10: #{tpu_custom_call.1} parent=1 // pred_check
      _
    $region11: #{tpu_custom_call.1} parent=1 // pred_check_branch
      %35 = sbr.rel (0) target = $region13
    $region12: #{tpu_custom_call.1} parent=1 // pred_region
      _
    $region13: #{tpu_custom_call.1} parent=1 // pred_fallthru
      _
    // Predicated region
    $region14: #{tpu_custom_call.1} parent=1 // pred_check
      _
    $region15: #{tpu_custom_call.1} parent=1 // pred_check_branch
      %37 = sbr.rel (0) target = $region17
    $region16: #{tpu_custom_call.1} parent=1 // pred_region
      _
    $region17: #{tpu_custom_call.1} parent=1 // pred_fallthru
      _
    // Predicated region
    $region18: #{tpu_custom_call.1} parent=1 // pred_check
      _
    $region19: #{tpu_custom_call.1} parent=1 // pred_check_branch
      %39 = sbr.rel (0) target = $region21
    $region20: #{tpu_custom_call.1} parent=1 // pred_region
      _
    $region21: #{tpu_custom_call.1} parent=1 // pred_fallthru
      _
    // Predicated region
    $region22: #{tpu_custom_call.1} parent=1 // pred_check
      _
    $region23: #{tpu_custom_call.1} parent=1 // pred_check_branch
      %41 = sbr.rel (0) target = $region25
    $region24: #{tpu_custom_call.1} parent=1 // pred_region
      %s43 = ssub.s32 2048, 2048
      %44 = vsyncadd [#allocation3], %s43
      %s45 = sshll.u32 [#allocation2], 4
      %s46 = int_to_ptr.vmem [resolvable:$true] %s45
      %51 = dma.hbm_to_vmem [thread:$0]  %s5, 2048, %s46, [#allocation3], 128, 128, 8
    $region25: #{tpu_custom_call.1} parent=1 // pred_fallthru
      _
    // Predicated region
    $region26: #{tpu_custom_call.1} parent=1 // pred_check
      _
    $region27: #{tpu_custom_call.1} parent=1 // pred_check_branch
      %53 = sbr.rel (0) target = $region29
    $region28: #{tpu_custom_call.1} parent=1 // pred_region
      _
    $region29: #{tpu_custom_call.1} parent=1 // pred_fallthru
      _
    // Predicated region
    $region30: #{tpu_custom_call.1} parent=1 // pred_check
      _
    $region31: #{tpu_custom_call.1} parent=1 // pred_check_branch
      %55 = sbr.rel (0) target = $region33
    $region32: #{tpu_custom_call.1} parent=1 // pred_region
      %s57 = ssub.s32 2048, 2048
      %58 = vsyncadd [#allocation6], %s57
      %s59 = sshll.u32 [#allocation5], 4
      %s60 = int_to_ptr.vmem [resolvable:$true] %s59
      %65 = dma.hbm_to_vmem [thread:$0]  %s7, 2048, %s60, [#allocation6], 128, 128, 8
    $region33: #{tpu_custom_call.1} parent=1 // pred_fallthru
      _
    // Predicated region
    $region34: #{tpu_custom_call.1} parent=1 // pred_check
      _
    $region35: #{tpu_custom_call.1} parent=1 // pred_check_branch
      %67 = sbr.rel (0) target = $region37
    $region36: #{tpu_custom_call.1} parent=1 // pred_region
      _
    $region37: #{tpu_custom_call.1} parent=1 // pred_fallthru
      _
    // Predicated region
    $region38: #{tpu_custom_call.1} parent=1 // pred_check
      _
    $region39: #{tpu_custom_call.1} parent=1 // pred_check_branch
      %69 = sbr.rel (0) target = $region41
    $region40: #{tpu_custom_call.1} parent=1 // pred_region
      %s71 = ssub.s32 2048, 2048
      %72 = vsyncadd [#allocation6], %s71
      %s73 = sshll.u32 [#allocation7], 4
      %s74 = int_to_ptr.vmem [resolvable:$true] %s73
      %79 = dma.hbm_to_vmem [thread:$0]  %s9, 2048, %s74, [#allocation6], 128, 128, 8
    $region41: #{tpu_custom_call.1} parent=1 // pred_fallthru
      _
    // Predicated region
    $region42: #{tpu_custom_call.1} parent=1 // pred_check
      _
    $region43: #{tpu_custom_call.1} parent=1 // pred_check_branch
      %81 = sbr.rel (0) target = $region45
    $region44: #{tpu_custom_call.1} parent=1 // pred_region
      _
    $region45: #{tpu_custom_call.1} parent=1 // pred_fallthru
      _
    // Predicated region
    $region46: #{tpu_custom_call.1} parent=1 // pred_check
      _
    $region47: #{tpu_custom_call.1} parent=1 // pred_check_branch
      %83 = sbr.rel (0) target = $region49
    $region48: #{tpu_custom_call.1} parent=1 // pred_region
      %s85 = ssub.s32 2048, 2048
      %86 = vsyncadd [#allocation9], %s85
      %s87 = sshll.u32 [#allocation8], 4
      %s88 = int_to_ptr.vmem [resolvable:$true] %s87
      %93 = dma.hbm_to_vmem [thread:$0]  %s11, 2048, %s88, [#allocation9], 128, 128, 8
    $region49: #{tpu_custom_call.1} parent=1 // pred_fallthru
      _
    // Predicated region
    $region50: #{tpu_custom_call.1} parent=1 // pred_check
      _
    $region51: #{tpu_custom_call.1} parent=1 // pred_check_branch
      %95 = sbr.rel (0) target = $region53
    $region52: #{tpu_custom_call.1} parent=1 // pred_region
      _
    $region53: #{tpu_custom_call.1} parent=1 // pred_fallthru
      _
    // Predicated region
    $region54: #{tpu_custom_call.1} parent=1 // pred_check
      _
    $region55: #{tpu_custom_call.1} parent=1 // pred_check_branch
      %97 = sbr.rel (0) target = $region57
    $region56: #{tpu_custom_call.1} parent=1 // pred_region
      _
    $region57: #{tpu_custom_call.1} parent=1 // pred_fallthru
      _
    // Predicated region
    $region58: #{tpu_custom_call.1} parent=1 // pred_check
      _
    $region59: #{tpu_custom_call.1} parent=1 // pred_check_branch
      %99 = sbr.rel (0) target = $region61
    $region60: #{tpu_custom_call.1} parent=1 // pred_region
      %s101 = ssub.s32 2048, 2048
      %102 = vsyncadd [#allocation9], %s101
      %s103 = sshll.u32 [#allocation10], 4
      %s104 = int_to_ptr.vmem [resolvable:$true] %s103
      %109 = dma.hbm_to_vmem [thread:$0]  %s14, 2048, %s104, [#allocation9], 128, 128, 8
    $region61: #{tpu_custom_call.1} parent=1 // pred_fallthru
      _
    // Predicated region
    $region62: #{tpu_custom_call.1} parent=1 // pred_check
      _
    $region63: #{tpu_custom_call.1} parent=1 // pred_check_branch
      %111 = sbr.rel (0) target = $region65
    $region64: #{tpu_custom_call.1} parent=1 // pred_region
      _
    $region65: #{tpu_custom_call.1} parent=1 // pred_fallthru
      _
    // Predicated region
    $region66: #{tpu_custom_call.1} parent=1 // pred_check
      _
    $region67: #{tpu_custom_call.1} parent=1 // pred_check_branch
      %113 = sbr.rel (0) target = $region69
    $region68: #{tpu_custom_call.1} parent=1 // pred_region
      %s115 = ssub.s32 2048, 2048
      %116 = vsyncadd [#allocation12], %s115
      %s117 = sshll.u32 [#allocation11], 4
      %s118 = int_to_ptr.vmem [resolvable:$true] %s117
      %123 = dma.hbm_to_vmem [thread:$0]  %s16, 2048, %s118, [#allocation12], 128, 128, 8
    $region69: #{tpu_custom_call.1} parent=1 // pred_fallthru
      _
    // Predicated region
    $region70: #{tpu_custom_call.1} parent=1 // pred_check
      _
    $region71: #{tpu_custom_call.1} parent=1 // pred_check_branch
      %125 = sbr.rel (0) target = $region73
    $region72: #{tpu_custom_call.1} parent=1 // pred_region
      _
    $region73: #{tpu_custom_call.1} parent=1 // pred_fallthru
      _
    // Predicated region
    $region74: #{tpu_custom_call.1} parent=1 // pred_check
      _
    $region75: #{tpu_custom_call.1} parent=1 // pred_check_branch
      %127 = sbr.rel (0) target = $region77
    $region76: #{tpu_custom_call.1} parent=1 // pred_region
      %s129 = ssub.s32 2048, 2048
      %130 = vsyncadd [#allocation12], %s129
      %s131 = sshll.u32 [#allocation13], 4
      %s132 = int_to_ptr.vmem [resolvable:$true] %s131
      %137 = dma.hbm_to_vmem [thread:$0]  %s18, 2048, %s132, [#allocation12], 128, 128, 8
    $region77: #{tpu_custom_call.1} parent=1 // pred_fallthru
      _
    // Predicated region
    $region78: #{tpu_custom_call.1} parent=1 // pred_check
      _
    $region79: #{tpu_custom_call.1} parent=1 // pred_check_branch
      %139 = sbr.rel (0) target = $region81
    $region80: #{tpu_custom_call.1} parent=1 // pred_region
      _
    $region81: #{tpu_custom_call.1} parent=1 // pred_fallthru
      _
    // Predicated region
    $region82: #{tpu_custom_call.1} parent=1 // pred_check
      _
    $region83: #{tpu_custom_call.1} parent=1 // pred_check_branch
      %141 = sbr.rel (0) target = $region85
    $region84: #{tpu_custom_call.1} parent=1 // pred_region
      %142 = dma.done [#allocation3], 2048
    $region85: #{tpu_custom_call.1} parent=1 // pred_fallthru
      _
    // Predicated region
    $region86: #{tpu_custom_call.1} parent=1 // pred_check
      _
    $region87: #{tpu_custom_call.1} parent=1 // pred_check_branch
      %144 = sbr.rel (0) target = $region89
    $region88: #{tpu_custom_call.1} parent=1 // pred_region
      %145 = dma.done [#allocation6], 2048
    $region89: #{tpu_custom_call.1} parent=1 // pred_fallthru
      _
    // Predicated region
    $region90: #{tpu_custom_call.1} parent=1 // pred_check
      _
    $region91: #{tpu_custom_call.1} parent=1 // pred_check_branch
      %147 = sbr.rel (0) target = $region93
    $region92: #{tpu_custom_call.1} parent=1 // pred_region
      %148 = dma.done [#allocation6], 2048
    $region93: #{tpu_custom_call.1} parent=1 // pred_fallthru
      _
    // Predicated region
    $region94: #{tpu_custom_call.1} parent=1 // pred_check
      _
    $region95: #{tpu_custom_call.1} parent=1 // pred_check_branch
      %150 = sbr.rel (0) target = $region97
    $region96: #{tpu_custom_call.1} parent=1 // pred_region
      %151 = dma.done [#allocation9], 2048
    $region97: #{tpu_custom_call.1} parent=1 // pred_fallthru
      _
    // Predicated region
    $region98: #{tpu_custom_call.1} parent=1 // pred_check
      _
    $region99: #{tpu_custom_call.1} parent=1 // pred_check_branch
      %153 = sbr.rel (0) target = $region101
    $region100: #{tpu_custom_call.1} parent=1 // pred_region
      %154 = dma.done [#allocation9], 2048
    $region101: #{tpu_custom_call.1} parent=1 // pred_fallthru
      _
    // Predicated region
    $region102: #{tpu_custom_call.1} parent=1 // pred_check
      _
    $region103: #{tpu_custom_call.1} parent=1 // pred_check_branch
      %156 = sbr.rel (0) target = $region105
    $region104: #{tpu_custom_call.1} parent=1 // pred_region
      %157 = dma.done [#allocation12], 2048
    $region105: #{tpu_custom_call.1} parent=1 // pred_fallthru
      _
    // Predicated region
    $region106: #{tpu_custom_call.1} parent=1 // pred_check
      _
    $region107: #{tpu_custom_call.1} parent=1 // pred_check_branch
      %159 = sbr.rel (0) target = $region109
    $region108: #{tpu_custom_call.1} parent=1 // pred_region
      %160 = dma.done [#allocation12], 2048
    $region109: #{tpu_custom_call.1} parent=1 // pred_fallthru
      _
    %v161 = vld [vmem:[%s0] sm:$0xff]
    %v162 = vld [vmem:[%s1] sm:$0xff]
    %v163 = vld [vmem:[%s2] sm:$0x3f]
    %v164 = vld [vmem:[%s3] sm:$0x3]
    %v165 = vld [vmem:[%s4] sm:$0x1]
    %vm166 = vcmask 15360
    %v168 = vsel %vm166, %v162, 0
    %vm170 = vcmask 1041408
    %v172 = vsel %vm170, %v164, 0
    %174 = vmatprep.subr.mxu0 0.0
    %175 = vmatpush1.msra.mxu0 %v172
    %176 = vmatprep.subr.mxu0 0.0
    %177 = vmatpush1.msra.mxu0 0.0
    %178 = vmatprep.subr.mxu0 0.0
    %179 = vmatpush1.msra.mxu0 0.0
    %180 = vmatprep.subr.mxu0 0.0
    %181 = vmatpush1.msra.mxu0 0.0
    %182 = vmatprep.subr.mxu0 0.0
    %183 = vmatpush1.msra.mxu0 0.0
    %184 = vmatprep.subr.mxu0 0.0
    %185 = vmatpush1.msra.mxu0 0.0
    %186 = vmatprep.subr.mxu0 0.0
    %187 = vmatpush1.msra.mxu0 0.0
    %188 = vmatprep.subr.mxu0 0.0
    %189 = vmatpush1.msra.mxu0 0.0
    %190 = vmatprep.subr.mxu0 0.0
    %191 = vmatpush1.msra.mxu0 0.0
    %192 = vmatprep.subr.mxu0 0.0
    %193 = vmatpush1.msra.mxu0 0.0
    %194 = vmatprep.subr.mxu0 0.0
    %195 = vmatpush1.msra.mxu0 0.0
    %196 = vmatprep.subr.mxu0 0.0
    %197 = vmatpush1.msra.mxu0 0.0
    %198 = vmatprep.subr.mxu0 0.0
    %199 = vmatpush1.msra.mxu0 0.0
    %200 = vmatprep.subr.mxu0 0.0
    %201 = vmatpush1.msra.mxu0 0.0
    %202 = vmatprep.subr.mxu0 0.0
    %203 = vmatpush1.msra.mxu0 0.0
    %204 = vmatprep.subr.mxu0 0.0
    %205 = vmatpush1.msra.mxu0 0.0
    %206 = vmatprep.subr.mxu0 0.0
    %207 = vmatpush1.msra.mxu0 0.0
    %208 = vmatprep.subr.mxu0 0.0
    %209 = vmatpush1.msra.mxu0 0.0
    %210 = vmatprep.subr.mxu0 0.0
    %211 = vmatpush1.msra.mxu0 0.0
    %212 = vmatprep.subr.mxu0 0.0
    %213 = vmatpush1.msra.mxu0 0.0
    %214 = vmatprep.subr.mxu0 0.0
    %215 = vmatpush1.msra.mxu0 0.0
    %216 = vmatprep.subr.mxu0 0.0
    %217 = vmatpush1.msra.mxu0 0.0
    %218 = vmatprep.subr.mxu0 0.0
    %219 = vmatpush1.msra.mxu0 0.0
    %220 = vmatprep.subr.mxu0 0.0
    %221 = vmatpush1.msra.mxu0 0.0
    %222 = vmatprep.subr.mxu0 0.0
    %223 = vmatpush1.msra.mxu0 0.0
    %224 = vmatprep.subr.mxu0 0.0
    %225 = vmatpush1.msra.mxu0 0.0
    %226 = vmatprep.subr.mxu0 0.0
    %227 = vmatpush1.msra.mxu0 0.0
    %228 = vmatprep.subr.mxu0 0.0
    %229 = vmatpush1.msra.mxu0 0.0
    %230 = vmatprep.subr.mxu0 0.0
    %231 = vmatpush1.msra.mxu0 0.0
    %232 = vmatprep.subr.mxu0 0.0
    %233 = vmatpush1.msra.mxu0 0.0
    %234 = vmatprep.subr.mxu0 0.0
    %235 = vmatpush1.msra.mxu0 0.0
    %236 = vmatprep.subr.mxu0 0.0
    %237 = vmatpush1.msra.mxu0 0.0
    %238 = vmatprep.mubr.f32.mxu0 0.0
    %239 = vmatmul.mubr.f32.gmra.mrb[0].mxu0 %v168
    %v240 = vpop.f32.mrb[0].mxu0
    %v241 = vadd.f32 0.0, %v240
    %v242 = vpop.f32.mrb[0].mxu0
    %243 = vdwg.mxu0
    %vm244 = vcmask 48128
    %v246 = vsel %vm244, %v161, 0
    %vm248 = vcmask 1045504
    %v250 = vsel %vm248, %v163, 0
    %252 = vmatprep.subr.mxu0 0.0
    %253 = vmatpush1.msra.mxu0 %v250
    %254 = vmatprep.subr.mxu0 0.0
    %255 = vmatpush1.msra.mxu0 0.0
    %256 = vmatprep.subr.mxu0 0.0
    %257 = vmatpush1.msra.mxu0 0.0
    %258 = vmatprep.subr.mxu0 0.0
    %259 = vmatpush1.msra.mxu0 0.0
    %260 = vmatprep.subr.mxu0 0.0
    %261 = vmatpush1.msra.mxu0 0.0
    %262 = vmatprep.subr.mxu0 0.0
    %263 = vmatpush1.msra.mxu0 0.0
    %264 = vmatprep.subr.mxu0 0.0
    %265 = vmatpush1.msra.mxu0 0.0
    %266 = vmatprep.subr.mxu0 0.0
    %267 = vmatpush1.msra.mxu0 0.0
    %268 = vmatprep.subr.mxu0 0.0
    %269 = vmatpush1.msra.mxu0 0.0
    %270 = vmatprep.subr.mxu0 0.0
    %271 = vmatpush1.msra.mxu0 0.0
    %272 = vmatprep.subr.mxu0 0.0
    %273 = vmatpush1.msra.mxu0 0.0
    %274 = vmatprep.subr.mxu0 0.0
    %275 = vmatpush1.msra.mxu0 0.0
    %276 = vmatprep.subr.mxu0 0.0
    %277 = vmatpush1.msra.mxu0 0.0
    %278 = vmatprep.subr.mxu0 0.0
    %279 = vmatpush1.msra.mxu0 0.0
    %280 = vmatprep.subr.mxu0 0.0
    %281 = vmatpush1.msra.mxu0 0.0
    %282 = vmatprep.subr.mxu0 0.0
    %283 = vmatpush1.msra.mxu0 0.0
    %284 = vmatprep.subr.mxu0 0.0
    %285 = vmatpush1.msra.mxu0 0.0
    %286 = vmatprep.subr.mxu0 0.0
    %287 = vmatpush1.msra.mxu0 0.0
    %288 = vmatprep.subr.mxu0 0.0
    %289 = vmatpush1.msra.mxu0 0.0
    %290 = vmatprep.subr.mxu0 0.0
    %291 = vmatpush1.msra.mxu0 0.0
    %292 = vmatprep.subr.mxu0 0.0
    %293 = vmatpush1.msra.mxu0 0.0
    %294 = vmatprep.subr.mxu0 0.0
    %295 = vmatpush1.msra.mxu0 0.0
    %296 = vmatprep.subr.mxu0 0.0
    %297 = vmatpush1.msra.mxu0 0.0
    %298 = vmatprep.subr.mxu0 0.0
    %299 = vmatpush1.msra.mxu0 0.0
    %300 = vmatprep.subr.mxu0 0.0
    %301 = vmatpush1.msra.mxu0 0.0
    %302 = vmatprep.subr.mxu0 0.0
    %303 = vmatpush1.msra.mxu0 0.0
    %304 = vmatprep.subr.mxu0 0.0
    %305 = vmatpush1.msra.mxu0 0.0
    %306 = vmatprep.subr.mxu0 0.0
    %307 = vmatpush1.msra.mxu0 0.0
    %308 = vmatprep.subr.mxu0 0.0
    %309 = vmatpush1.msra.mxu0 0.0
    %310 = vmatprep.subr.mxu0 0.0
    %311 = vmatpush1.msra.mxu0 0.0
    %312 = vmatprep.subr.mxu0 0.0
    %313 = vmatpush1.msra.mxu0 0.0
    %314 = vmatprep.subr.mxu0 0.0
    %315 = vmatpush1.msra.mxu0 0.0
    %316 = vmatprep.mubr.f32.mxu0 0.0
    %317 = vmatmul.mubr.f32.gmra.mrb[0].mxu0 %v246
    %v318 = vpop.f32.mrb[0].mxu0
    %v319 = vadd.f32 %v241, %v318
    %v320 = vpop.f32.mrb[0].mxu0
    %321 = vdwg.mxu0
    %v323 = vlaneseq
    %v324 = vshrl.u32 %v323, 7
    %v325 = vsub.s32 0, %v324
    %v326 = vrot.slane %v165, %v325
    %v328 = vadd.f32 %v319, %v326
    %v329 = vmax.f32 %v328, 0.0
    %v330 = vld [vmem:[#allocation2] sm:$0xff]
    %v331 = vld [vmem:[#allocation2 + $0x8] sm:$0xff]
    %v332 = vld [vmem:[#allocation2 + $0x10] sm:$0xff]
    %v333 = vld [vmem:[#allocation2 + $0x18] sm:$0xff]
    %v334 = vld [vmem:[#allocation2 + $0x20] sm:$0xff]
    %v335 = vld [vmem:[#allocation2 + $0x28] sm:$0xff]
    %v336 = vld [vmem:[#allocation2 + $0x30] sm:$0xff]
    %v337 = vld [vmem:[#allocation2 + $0x38] sm:$0xff]
    %v338 = vld [vmem:[#allocation2 + $0x40] sm:$0xff]
    %v339 = vld [vmem:[#allocation2 + $0x48] sm:$0xff]
    %v340 = vld [vmem:[#allocation2 + $0x50] sm:$0xff]
    %v341 = vld [vmem:[#allocation2 + $0x58] sm:$0xff]
    %v342 = vld [vmem:[#allocation2 + $0x60] sm:$0xff]
    %v343 = vld [vmem:[#allocation2 + $0x68] sm:$0xff]
    %v344 = vld [vmem:[#allocation2 + $0x70] sm:$0xff]
    %v345 = vld [vmem:[#allocation2 + $0x78] sm:$0xff]
    %v346 = vld [vmem:[%s6] sm:$0x1]
    %v348 = vlaneseq
    %v349 = vshrl.u32 %v348, 7
    %v350 = vsub.s32 0, %v349
    %v351 = vrot.slane %v346, %v350
    %353 = vmatprep.subr.mxu0 0.0
    %354 = vmatpush1.msra.mxu0 %v330
    %355 = vmatprep.subr.mxu0 0.0
    %356 = vmatpush1.msra.mxu0 %v331
    %357 = vmatprep.subr.mxu0 0.0
    %358 = vmatpush1.msra.mxu0 %v332
    %359 = vmatprep.subr.mxu0 0.0
    %360 = vmatpush1.msra.mxu0 %v333
    %361 = vmatprep.subr.mxu0 0.0
    %362 = vmatpush1.msra.mxu0 %v334
    %363 = vmatprep.subr.mxu0 0.0
    %364 = vmatpush1.msra.mxu0 %v335
    %365 = vmatprep.subr.mxu0 0.0
    %366 = vmatpush1.msra.mxu0 %v336
    %367 = vmatprep.subr.mxu0 0.0
    %368 = vmatpush1.msra.mxu0 %v337
    %369 = vmatprep.subr.mxu0 0.0
    %370 = vmatpush1.msra.mxu0 %v338
    %371 = vmatprep.subr.mxu0 0.0
    %372 = vmatpush1.msra.mxu0 %v339
    %373 = vmatprep.subr.mxu0 0.0
    %374 = vmatpush1.msra.mxu0 %v340
    %375 = vmatprep.subr.mxu0 0.0
    %376 = vmatpush1.msra.mxu0 %v341
    %377 = vmatprep.subr.mxu0 0.0
    %378 = vmatpush1.msra.mxu0 %v342
    %379 = vmatprep.subr.mxu0 0.0
    %380 = vmatpush1.msra.mxu0 %v343
    %381 = vmatprep.subr.mxu0 0.0
    %382 = vmatpush1.msra.mxu0 %v344
    %383 = vmatprep.subr.mxu0 0.0
    %384 = vmatpush1.msra.mxu0 %v345
    %385 = vmatprep.subr.mxu0 0.0
    %386 = vmatpush1.msra.mxu0 0.0
    %387 = vmatprep.subr.mxu0 0.0
    %388 = vmatpush1.msra.mxu0 0.0
    %389 = vmatprep.subr.mxu0 0.0
    %390 = vmatpush1.msra.mxu0 0.0
    %391 = vmatprep.subr.mxu0 0.0
    %392 = vmatpush1.msra.mxu0 0.0
    %393 = vmatprep.subr.mxu0 0.0
    %394 = vmatpush1.msra.mxu0 0.0
    %395 = vmatprep.subr.mxu0 0.0
    %396 = vmatpush1.msra.mxu0 0.0
    %397 = vmatprep.subr.mxu0 0.0
    %398 = vmatpush1.msra.mxu0 0.0
    %399 = vmatprep.subr.mxu0 0.0
    %400 = vmatpush1.msra.mxu0 0.0
    %401 = vmatprep.subr.mxu0 0.0
    %402 = vmatpush1.msra.mxu0 0.0
    %403 = vmatprep.subr.mxu0 0.0
    %404 = vmatpush1.msra.mxu0 0.0
    %405 = vmatprep.subr.mxu0 0.0
    %406 = vmatpush1.msra.mxu0 0.0
    %407 = vmatprep.subr.mxu0 0.0
    %408 = vmatpush1.msra.mxu0 0.0
    %409 = vmatprep.subr.mxu0 0.0
    %410 = vmatpush1.msra.mxu0 0.0
    %411 = vmatprep.subr.mxu0 0.0
    %412 = vmatpush1.msra.mxu0 0.0
    %413 = vmatprep.subr.mxu0 0.0
    %414 = vmatpush1.msra.mxu0 0.0
    %415 = vmatprep.subr.mxu0 0.0
    %416 = vmatpush1.msra.mxu0 0.0
    %417 = vmatprep.mubr.f32.mxu0 0.0
    %418 = vmatmul.mubr.f32.gmra.mrb[0].mxu0 %v329
    %v419 = vpop.f32.mrb[0].mxu0
    %v420 = vadd.f32 %v351, %v419
    %v421 = vpop.f32.mrb[0].mxu0
    %422 = vdwg.mxu0
    %v423 = vmax.f32 %v420, 0.0
    %v424 = vld [vmem:[#allocation5] sm:$0xff]
    %v425 = vld [vmem:[#allocation5 + $0x8] sm:$0xff]
    %v426 = vld [vmem:[#allocation5 + $0x10] sm:$0xff]
    %v427 = vld [vmem:[#allocation5 + $0x18] sm:$0xff]
    %v428 = vld [vmem:[#allocation5 + $0x20] sm:$0xff]
    %v429 = vld [vmem:[#allocation5 + $0x28] sm:$0xff]
    %v430 = vld [vmem:[#allocation5 + $0x30] sm:$0xff]
    %v431 = vld [vmem:[#allocation5 + $0x38] sm:$0xff]
    %v432 = vld [vmem:[#allocation5 + $0x40] sm:$0xff]
    %v433 = vld [vmem:[#allocation5 + $0x48] sm:$0xff]
    %v434 = vld [vmem:[#allocation5 + $0x50] sm:$0xff]
    %v435 = vld [vmem:[#allocation5 + $0x58] sm:$0xff]
    %v436 = vld [vmem:[#allocation5 + $0x60] sm:$0xff]
    %v437 = vld [vmem:[#allocation5 + $0x68] sm:$0xff]
    %v438 = vld [vmem:[#allocation5 + $0x70] sm:$0xff]
    %v439 = vld [vmem:[#allocation5 + $0x78] sm:$0xff]
    %v440 = vld [vmem:[%s8] sm:$0x1]
    %v442 = vlaneseq
    %v443 = vshrl.u32 %v442, 7
    %v444 = vsub.s32 0, %v443
    %v445 = vrot.slane %v440, %v444
    %447 = vmatprep.subr.mxu0 0.0
    %448 = vmatpush1.msra.mxu0 %v424
    %449 = vmatprep.subr.mxu0 0.0
    %450 = vmatpush1.msra.mxu0 %v425
    %451 = vmatprep.subr.mxu0 0.0
    %452 = vmatpush1.msra.mxu0 %v426
    %453 = vmatprep.subr.mxu0 0.0
    %454 = vmatpush1.msra.mxu0 %v427
    %455 = vmatprep.subr.mxu0 0.0
    %456 = vmatpush1.msra.mxu0 %v428
    %457 = vmatprep.subr.mxu0 0.0
    %458 = vmatpush1.msra.mxu0 %v429
    %459 = vmatprep.subr.mxu0 0.0
    %460 = vmatpush1.msra.mxu0 %v430
    %461 = vmatprep.subr.mxu0 0.0
    %462 = vmatpush1.msra.mxu0 %v431
    %463 = vmatprep.subr.mxu0 0.0
    %464 = vmatpush1.msra.mxu0 %v432
    %465 = vmatprep.subr.mxu0 0.0
    %466 = vmatpush1.msra.mxu0 %v433
    %467 = vmatprep.subr.mxu0 0.0
    %468 = vmatpush1.msra.mxu0 %v434
    %469 = vmatprep.subr.mxu0 0.0
    %470 = vmatpush1.msra.mxu0 %v435
    %471 = vmatprep.subr.mxu0 0.0
    %472 = vmatpush1.msra.mxu0 %v436
    %473 = vmatprep.subr.mxu0 0.0
    %474 = vmatpush1.msra.mxu0 %v437
    %475 = vmatprep.subr.mxu0 0.0
    %476 = vmatpush1.msra.mxu0 %v438
    %477 = vmatprep.subr.mxu0 0.0
    %478 = vmatpush1.msra.mxu0 %v439
    %479 = vmatprep.subr.mxu0 0.0
    %480 = vmatpush1.msra.mxu0 0.0
    %481 = vmatprep.subr.mxu0 0.0
    %482 = vmatpush1.msra.mxu0 0.0
    %483 = vmatprep.subr.mxu0 0.0
    %484 = vmatpush1.msra.mxu0 0.0
    %485 = vmatprep.subr.mxu0 0.0
    %486 = vmatpush1.msra.mxu0 0.0
    %487 = vmatprep.subr.mxu0 0.0
    %488 = vmatpush1.msra.mxu0 0.0
    %489 = vmatprep.subr.mxu0 0.0
    %490 = vmatpush1.msra.mxu0 0.0
    %491 = vmatprep.subr.mxu0 0.0
    %492 = vmatpush1.msra.mxu0 0.0
    %493 = vmatprep.subr.mxu0 0.0
    %494 = vmatpush1.msra.mxu0 0.0
    %495 = vmatprep.subr.mxu0 0.0
    %496 = vmatpush1.msra.mxu0 0.0
    %497 = vmatprep.subr.mxu0 0.0
    %498 = vmatpush1.msra.mxu0 0.0
    %499 = vmatprep.subr.mxu0 0.0
    %500 = vmatpush1.msra.mxu0 0.0
    %501 = vmatprep.subr.mxu0 0.0
    %502 = vmatpush1.msra.mxu0 0.0
    %503 = vmatprep.subr.mxu0 0.0
    %504 = vmatpush1.msra.mxu0 0.0
    %505 = vmatprep.subr.mxu0 0.0
    %506 = vmatpush1.msra.mxu0 0.0
    %507 = vmatprep.subr.mxu0 0.0
    %508 = vmatpush1.msra.mxu0 0.0
    %509 = vmatprep.subr.mxu0 0.0
    %510 = vmatpush1.msra.mxu0 0.0
    %511 = vmatprep.mubr.f32.mxu0 0.0
    %512 = vmatmul.mubr.f32.gmra.mrb[0].mxu0 %v423
    %v513 = vpop.f32.mrb[0].mxu0
    %v514 = vadd.f32 %v445, %v513
    %v515 = vpop.f32.mrb[0].mxu0
    %516 = vdwg.mxu0
    %v517 = vmax.f32 %v514, 0.0
    %v518 = vld [vmem:[#allocation7] sm:$0xff]
    %v519 = vld [vmem:[#allocation7 + $0x8] sm:$0xff]
    %v520 = vld [vmem:[#allocation7 + $0x10] sm:$0xff]
    %v521 = vld [vmem:[#allocation7 + $0x18] sm:$0xff]
    %v522 = vld [vmem:[#allocation7 + $0x20] sm:$0xff]
    %v523 = vld [vmem:[#allocation7 + $0x28] sm:$0xff]
    %v524 = vld [vmem:[#allocation7 + $0x30] sm:$0xff]
    %v525 = vld [vmem:[#allocation7 + $0x38] sm:$0xff]
    %v526 = vld [vmem:[#allocation7 + $0x40] sm:$0xff]
    %v527 = vld [vmem:[#allocation7 + $0x48] sm:$0xff]
    %v528 = vld [vmem:[#allocation7 + $0x50] sm:$0xff]
    %v529 = vld [vmem:[#allocation7 + $0x58] sm:$0xff]
    %v530 = vld [vmem:[#allocation7 + $0x60] sm:$0xff]
    %v531 = vld [vmem:[#allocation7 + $0x68] sm:$0xff]
    %v532 = vld [vmem:[#allocation7 + $0x70] sm:$0xff]
    %v533 = vld [vmem:[#allocation7 + $0x78] sm:$0xff]
    %v534 = vld [vmem:[%s10] sm:$0x1]
    %v536 = vlaneseq
    %v537 = vshrl.u32 %v536, 7
    %v538 = vsub.s32 0, %v537
    %v539 = vrot.slane %v534, %v538
    %541 = vmatprep.subr.mxu0 0.0
    %542 = vmatpush1.msra.mxu0 %v518
    %543 = vmatprep.subr.mxu0 0.0
    %544 = vmatpush1.msra.mxu0 %v519
    %545 = vmatprep.subr.mxu0 0.0
    %546 = vmatpush1.msra.mxu0 %v520
    %547 = vmatprep.subr.mxu0 0.0
    %548 = vmatpush1.msra.mxu0 %v521
    %549 = vmatprep.subr.mxu0 0.0
    %550 = vmatpush1.msra.mxu0 %v522
    %551 = vmatprep.subr.mxu0 0.0
    %552 = vmatpush1.msra.mxu0 %v523
    %553 = vmatprep.subr.mxu0 0.0
    %554 = vmatpush1.msra.mxu0 %v524
    %555 = vmatprep.subr.mxu0 0.0
    %556 = vmatpush1.msra.mxu0 %v525
    %557 = vmatprep.subr.mxu0 0.0
    %558 = vmatpush1.msra.mxu0 %v526
    %559 = vmatprep.subr.mxu0 0.0
    %560 = vmatpush1.msra.mxu0 %v527
    %561 = vmatprep.subr.mxu0 0.0
    %562 = vmatpush1.msra.mxu0 %v528
    %563 = vmatprep.subr.mxu0 0.0
    %564 = vmatpush1.msra.mxu0 %v529
    %565 = vmatprep.subr.mxu0 0.0
    %566 = vmatpush1.msra.mxu0 %v530
    %567 = vmatprep.subr.mxu0 0.0
    %568 = vmatpush1.msra.mxu0 %v531
    %569 = vmatprep.subr.mxu0 0.0
    %570 = vmatpush1.msra.mxu0 %v532
    %571 = vmatprep.subr.mxu0 0.0
    %572 = vmatpush1.msra.mxu0 %v533
    %573 = vmatprep.subr.mxu0 0.0
    %574 = vmatpush1.msra.mxu0 0.0
    %575 = vmatprep.subr.mxu0 0.0
    %576 = vmatpush1.msra.mxu0 0.0
    %577 = vmatprep.subr.mxu0 0.0
    %578 = vmatpush1.msra.mxu0 0.0
    %579 = vmatprep.subr.mxu0 0.0
    %580 = vmatpush1.msra.mxu0 0.0
    %581 = vmatprep.subr.mxu0 0.0
    %582 = vmatpush1.msra.mxu0 0.0
    %583 = vmatprep.subr.mxu0 0.0
    %584 = vmatpush1.msra.mxu0 0.0
    %585 = vmatprep.subr.mxu0 0.0
    %586 = vmatpush1.msra.mxu0 0.0
    %587 = vmatprep.subr.mxu0 0.0
    %588 = vmatpush1.msra.mxu0 0.0
    %589 = vmatprep.subr.mxu0 0.0
    %590 = vmatpush1.msra.mxu0 0.0
    %591 = vmatprep.subr.mxu0 0.0
    %592 = vmatpush1.msra.mxu0 0.0
    %593 = vmatprep.subr.mxu0 0.0
    %594 = vmatpush1.msra.mxu0 0.0
    %595 = vmatprep.subr.mxu0 0.0
    %596 = vmatpush1.msra.mxu0 0.0
    %597 = vmatprep.subr.mxu0 0.0
    %598 = vmatpush1.msra.mxu0 0.0
    %599 = vmatprep.subr.mxu0 0.0
    %600 = vmatpush1.msra.mxu0 0.0
    %601 = vmatprep.subr.mxu0 0.0
    %602 = vmatpush1.msra.mxu0 0.0
    %603 = vmatprep.subr.mxu0 0.0
    %604 = vmatpush1.msra.mxu0 0.0
    %605 = vmatprep.mubr.f32.mxu0 0.0
    %606 = vmatmul.mubr.f32.gmra.mrb[0].mxu0 %v517
    %v607 = vpop.f32.mrb[0].mxu0
    %v608 = vadd.f32 %v539, %v607
    %v609 = vpop.f32.mrb[0].mxu0
    %610 = vdwg.mxu0
    %v611 = vld [vmem:[#allocation8] sm:$0xff]
    %v612 = vld [vmem:[#allocation8 + $0x8] sm:$0xff]
    %v613 = vld [vmem:[#allocation8 + $0x10] sm:$0xff]
    %v614 = vld [vmem:[#allocation8 + $0x18] sm:$0xff]
    %v615 = vld [vmem:[#allocation8 + $0x20] sm:$0xff]
    %v616 = vld [vmem:[#allocation8 + $0x28] sm:$0xff]
    %v617 = vld [vmem:[#allocation8 + $0x30] sm:$0xff]
    %v618 = vld [vmem:[#allocation8 + $0x38] sm:$0xff]
    %v619 = vld [vmem:[#allocation8 + $0x40] sm:$0xff]
    %v620 = vld [vmem:[#allocation8 + $0x48] sm:$0xff]
    %v621 = vld [vmem:[#allocation8 + $0x50] sm:$0xff]
    %v622 = vld [vmem:[#allocation8 + $0x58] sm:$0xff]
    %v623 = vld [vmem:[#allocation8 + $0x60] sm:$0xff]
    %v624 = vld [vmem:[#allocation8 + $0x68] sm:$0xff]
    %v625 = vld [vmem:[#allocation8 + $0x70] sm:$0xff]
    %v626 = vld [vmem:[#allocation8 + $0x78] sm:$0xff]
    %v627 = vld [vmem:[%s12] sm:$0x3]
    %v628 = vld [vmem:[%s13] sm:$0x1]
    %v630 = vsel %vm170, %v627, 0
    %632 = vmatprep.subr.mxu0 0.0
    %633 = vmatpush1.msra.mxu0 %v630
    %634 = vmatprep.subr.mxu0 0.0
    %635 = vmatpush1.msra.mxu0 0.0
    %636 = vmatprep.subr.mxu0 0.0
    %637 = vmatpush1.msra.mxu0 0.0
    %638 = vmatprep.subr.mxu0 0.0
    %639 = vmatpush1.msra.mxu0 0.0
    %640 = vmatprep.subr.mxu0 0.0
    %641 = vmatpush1.msra.mxu0 0.0
    %642 = vmatprep.subr.mxu0 0.0
    %643 = vmatpush1.msra.mxu0 0.0
    %644 = vmatprep.subr.mxu0 0.0
    %645 = vmatpush1.msra.mxu0 0.0
    %646 = vmatprep.subr.mxu0 0.0
    %647 = vmatpush1.msra.mxu0 0.0
    %648 = vmatprep.subr.mxu0 0.0
    %649 = vmatpush1.msra.mxu0 0.0
    %650 = vmatprep.subr.mxu0 0.0
    %651 = vmatpush1.msra.mxu0 0.0
    %652 = vmatprep.subr.mxu0 0.0
    %653 = vmatpush1.msra.mxu0 0.0
    %654 = vmatprep.subr.mxu0 0.0
    %655 = vmatpush1.msra.mxu0 0.0
    %656 = vmatprep.subr.mxu0 0.0
    %657 = vmatpush1.msra.mxu0 0.0
    %658 = vmatprep.subr.mxu0 0.0
    %659 = vmatpush1.msra.mxu0 0.0
    %660 = vmatprep.subr.mxu0 0.0
    %661 = vmatpush1.msra.mxu0 0.0
    %662 = vmatprep.subr.mxu0 0.0
    %663 = vmatpush1.msra.mxu0 0.0
    %664 = vmatprep.subr.mxu0 0.0
    %665 = vmatpush1.msra.mxu0 0.0
    %666 = vmatprep.subr.mxu0 0.0
    %667 = vmatpush1.msra.mxu0 0.0
    %668 = vmatprep.subr.mxu0 0.0
    %669 = vmatpush1.msra.mxu0 0.0
    %670 = vmatprep.subr.mxu0 0.0
    %671 = vmatpush1.msra.mxu0 0.0
    %672 = vmatprep.subr.mxu0 0.0
    %673 = vmatpush1.msra.mxu0 0.0
    %674 = vmatprep.subr.mxu0 0.0
    %675 = vmatpush1.msra.mxu0 0.0
    %676 = vmatprep.subr.mxu0 0.0
    %677 = vmatpush1.msra.mxu0 0.0
    %678 = vmatprep.subr.mxu0 0.0
    %679 = vmatpush1.msra.mxu0 0.0
    %680 = vmatprep.subr.mxu0 0.0
    %681 = vmatpush1.msra.mxu0 0.0
    %682 = vmatprep.subr.mxu0 0.0
    %683 = vmatpush1.msra.mxu0 0.0
    %684 = vmatprep.subr.mxu0 0.0
    %685 = vmatpush1.msra.mxu0 0.0
    %686 = vmatprep.subr.mxu0 0.0
    %687 = vmatpush1.msra.mxu0 0.0
    %688 = vmatprep.subr.mxu0 0.0
    %689 = vmatpush1.msra.mxu0 0.0
    %690 = vmatprep.subr.mxu0 0.0
    %691 = vmatpush1.msra.mxu0 0.0
    %692 = vmatprep.subr.mxu0 0.0
    %693 = vmatpush1.msra.mxu0 0.0
    %694 = vmatprep.subr.mxu0 0.0
    %695 = vmatpush1.msra.mxu0 0.0
    %696 = vmatprep.mubr.f32.mxu0 0.0
    %697 = vmatmul.mubr.f32.gmra.mrb[0].mxu0 %v168
    %v698 = vpop.f32.mrb[0].mxu0
    %v699 = vadd.f32 0.0, %v698
    %v700 = vpop.f32.mrb[0].mxu0
    %701 = vdwg.mxu0
    %702 = vmatprep.subr.mxu0 0.0
    %703 = vmatpush1.msra.mxu0 %v611
    %704 = vmatprep.subr.mxu0 0.0
    %705 = vmatpush1.msra.mxu0 %v612
    %706 = vmatprep.subr.mxu0 0.0
    %707 = vmatpush1.msra.mxu0 %v613
    %708 = vmatprep.subr.mxu0 0.0
    %709 = vmatpush1.msra.mxu0 %v614
    %710 = vmatprep.subr.mxu0 0.0
    %711 = vmatpush1.msra.mxu0 %v615
    %712 = vmatprep.subr.mxu0 0.0
    %713 = vmatpush1.msra.mxu0 %v616
    %714 = vmatprep.subr.mxu0 0.0
    %715 = vmatpush1.msra.mxu0 %v617
    %716 = vmatprep.subr.mxu0 0.0
    %717 = vmatpush1.msra.mxu0 %v618
    %718 = vmatprep.subr.mxu0 0.0
    %719 = vmatpush1.msra.mxu0 %v619
    %720 = vmatprep.subr.mxu0 0.0
    %721 = vmatpush1.msra.mxu0 %v620
    %722 = vmatprep.subr.mxu0 0.0
    %723 = vmatpush1.msra.mxu0 %v621
    %724 = vmatprep.subr.mxu0 0.0
    %725 = vmatpush1.msra.mxu0 %v622
    %726 = vmatprep.subr.mxu0 0.0
    %727 = vmatpush1.msra.mxu0 %v623
    %728 = vmatprep.subr.mxu0 0.0
    %729 = vmatpush1.msra.mxu0 %v624
    %730 = vmatprep.subr.mxu0 0.0
    %731 = vmatpush1.msra.mxu0 %v625
    %732 = vmatprep.subr.mxu0 0.0
    %733 = vmatpush1.msra.mxu0 %v626
    %734 = vmatprep.subr.mxu0 0.0
    %735 = vmatpush1.msra.mxu0 0.0
    %736 = vmatprep.subr.mxu0 0.0
    %737 = vmatpush1.msra.mxu0 0.0
    %738 = vmatprep.subr.mxu0 0.0
    %739 = vmatpush1.msra.mxu0 0.0
    %740 = vmatprep.subr.mxu0 0.0
    %741 = vmatpush1.msra.mxu0 0.0
    %742 = vmatprep.subr.mxu0 0.0
    %743 = vmatpush1.msra.mxu0 0.0
    %744 = vmatprep.subr.mxu0 0.0
    %745 = vmatpush1.msra.mxu0 0.0
    %746 = vmatprep.subr.mxu0 0.0
    %747 = vmatpush1.msra.mxu0 0.0
    %748 = vmatprep.subr.mxu0 0.0
    %749 = vmatpush1.msra.mxu0 0.0
    %750 = vmatprep.subr.mxu0 0.0
    %751 = vmatpush1.msra.mxu0 0.0
    %752 = vmatprep.subr.mxu0 0.0
    %753 = vmatpush1.msra.mxu0 0.0
    %754 = vmatprep.subr.mxu0 0.0
    %755 = vmatpush1.msra.mxu0 0.0
    %756 = vmatprep.subr.mxu0 0.0
    %757 = vmatpush1.msra.mxu0 0.0
    %758 = vmatprep.subr.mxu0 0.0
    %759 = vmatpush1.msra.mxu0 0.0
    %760 = vmatprep.subr.mxu0 0.0
    %761 = vmatpush1.msra.mxu0 0.0
    %762 = vmatprep.subr.mxu0 0.0
    %763 = vmatpush1.msra.mxu0 0.0
    %764 = vmatprep.subr.mxu0 0.0
    %765 = vmatpush1.msra.mxu0 0.0
    %766 = vmatprep.mubr.f32.mxu0 0.0
    %767 = vmatmul.mubr.f32.gmra.mrb[0].mxu0 %v608
    %v768 = vpop.f32.mrb[0].mxu0
    %v769 = vadd.f32 %v699, %v768
    %v770 = vpop.f32.mrb[0].mxu0
    %771 = vdwg.mxu0
    %v773 = vlaneseq
    %v774 = vshrl.u32 %v773, 7
    %v775 = vsub.s32 0, %v774
    %v776 = vrot.slane %v628, %v775
    %v778 = vadd.f32 %v769, %v776
    %v779 = vmax.f32 %v778, 0.0
    %v780 = vld [vmem:[#allocation10] sm:$0xff]
    %v781 = vld [vmem:[#allocation10 + $0x8] sm:$0xff]
    %v782 = vld [vmem:[#allocation10 + $0x10] sm:$0xff]
    %v783 = vld [vmem:[#allocation10 + $0x18] sm:$0xff]
    %v784 = vld [vmem:[#allocation10 + $0x20] sm:$0xff]
    %v785 = vld [vmem:[#allocation10 + $0x28] sm:$0xff]
    %v786 = vld [vmem:[#allocation10 + $0x30] sm:$0xff]
    %v787 = vld [vmem:[#allocation10 + $0x38] sm:$0xff]
    %v788 = vld [vmem:[#allocation10 + $0x40] sm:$0xff]
    %v789 = vld [vmem:[#allocation10 + $0x48] sm:$0xff]
    %v790 = vld [vmem:[#allocation10 + $0x50] sm:$0xff]
    %v791 = vld [vmem:[#allocation10 + $0x58] sm:$0xff]
    %v792 = vld [vmem:[#allocation10 + $0x60] sm:$0xff]
    %v793 = vld [vmem:[#allocation10 + $0x68] sm:$0xff]
    %v794 = vld [vmem:[#allocation10 + $0x70] sm:$0xff]
    %v795 = vld [vmem:[#allocation10 + $0x78] sm:$0xff]
    %v796 = vld [vmem:[%s15] sm:$0x1]
    %v798 = vlaneseq
    %v799 = vshrl.u32 %v798, 7
    %v800 = vsub.s32 0, %v799
    %v801 = vrot.slane %v796, %v800
    %803 = vmatprep.subr.mxu0 0.0
    %804 = vmatpush1.msra.mxu0 %v780
    %805 = vmatprep.subr.mxu0 0.0
    %806 = vmatpush1.msra.mxu0 %v781
    %807 = vmatprep.subr.mxu0 0.0
    %808 = vmatpush1.msra.mxu0 %v782
    %809 = vmatprep.subr.mxu0 0.0
    %810 = vmatpush1.msra.mxu0 %v783
    %811 = vmatprep.subr.mxu0 0.0
    %812 = vmatpush1.msra.mxu0 %v784
    %813 = vmatprep.subr.mxu0 0.0
    %814 = vmatpush1.msra.mxu0 %v785
    %815 = vmatprep.subr.mxu0 0.0
    %816 = vmatpush1.msra.mxu0 %v786
    %817 = vmatprep.subr.mxu0 0.0
    %818 = vmatpush1.msra.mxu0 %v787
    %819 = vmatprep.subr.mxu0 0.0
    %820 = vmatpush1.msra.mxu0 %v788
    %821 = vmatprep.subr.mxu0 0.0
    %822 = vmatpush1.msra.mxu0 %v789
    %823 = vmatprep.subr.mxu0 0.0
    %824 = vmatpush1.msra.mxu0 %v790
    %825 = vmatprep.subr.mxu0 0.0
    %826 = vmatpush1.msra.mxu0 %v791
    %827 = vmatprep.subr.mxu0 0.0
    %828 = vmatpush1.msra.mxu0 %v792
    %829 = vmatprep.subr.mxu0 0.0
    %830 = vmatpush1.msra.mxu0 %v793
    %831 = vmatprep.subr.mxu0 0.0
    %832 = vmatpush1.msra.mxu0 %v794
    %833 = vmatprep.subr.mxu0 0.0
    %834 = vmatpush1.msra.mxu0 %v795
    %835 = vmatprep.subr.mxu0 0.0
    %836 = vmatpush1.msra.mxu0 0.0
    %837 = vmatprep.subr.mxu0 0.0
    %838 = vmatpush1.msra.mxu0 0.0
    %839 = vmatprep.subr.mxu0 0.0
    %840 = vmatpush1.msra.mxu0 0.0
    %841 = vmatprep.subr.mxu0 0.0
    %842 = vmatpush1.msra.mxu0 0.0
    %843 = vmatprep.subr.mxu0 0.0
    %844 = vmatpush1.msra.mxu0 0.0
    %845 = vmatprep.subr.mxu0 0.0
    %846 = vmatpush1.msra.mxu0 0.0
    %847 = vmatprep.subr.mxu0 0.0
    %848 = vmatpush1.msra.mxu0 0.0
    %849 = vmatprep.subr.mxu0 0.0
    %850 = vmatpush1.msra.mxu0 0.0
    %851 = vmatprep.subr.mxu0 0.0
    %852 = vmatpush1.msra.mxu0 0.0
    %853 = vmatprep.subr.mxu0 0.0
    %854 = vmatpush1.msra.mxu0 0.0
    %855 = vmatprep.subr.mxu0 0.0
    %856 = vmatpush1.msra.mxu0 0.0
    %857 = vmatprep.subr.mxu0 0.0
    %858 = vmatpush1.msra.mxu0 0.0
    %859 = vmatprep.subr.mxu0 0.0
    %860 = vmatpush1.msra.mxu0 0.0
    %861 = vmatprep.subr.mxu0 0.0
    %862 = vmatpush1.msra.mxu0 0.0
    %863 = vmatprep.subr.mxu0 0.0
    %864 = vmatpush1.msra.mxu0 0.0
    %865 = vmatprep.subr.mxu0 0.0
    %866 = vmatpush1.msra.mxu0 0.0
    %867 = vmatprep.mubr.f32.mxu0 0.0
    %868 = vmatmul.mubr.f32.gmra.mrb[0].mxu0 %v779
    %v869 = vpop.f32.mrb[0].mxu0
    %v870 = vadd.f32 %v801, %v869
    %v871 = vpop.f32.mrb[0].mxu0
    %872 = vdwg.mxu0
    %v873 = vmax.f32 %v870, 0.0
    %v874 = vld [vmem:[#allocation11] sm:$0xff]
    %v875 = vld [vmem:[#allocation11 + $0x8] sm:$0xff]
    %v876 = vld [vmem:[#allocation11 + $0x10] sm:$0xff]
    %v877 = vld [vmem:[#allocation11 + $0x18] sm:$0xff]
    %v878 = vld [vmem:[#allocation11 + $0x20] sm:$0xff]
    %v879 = vld [vmem:[#allocation11 + $0x28] sm:$0xff]
    %v880 = vld [vmem:[#allocation11 + $0x30] sm:$0xff]
    %v881 = vld [vmem:[#allocation11 + $0x38] sm:$0xff]
    %v882 = vld [vmem:[#allocation11 + $0x40] sm:$0xff]
    %v883 = vld [vmem:[#allocation11 + $0x48] sm:$0xff]
    %v884 = vld [vmem:[#allocation11 + $0x50] sm:$0xff]
    %v885 = vld [vmem:[#allocation11 + $0x58] sm:$0xff]
    %v886 = vld [vmem:[#allocation11 + $0x60] sm:$0xff]
    %v887 = vld [vmem:[#allocation11 + $0x68] sm:$0xff]
    %v888 = vld [vmem:[#allocation11 + $0x70] sm:$0xff]
    %v889 = vld [vmem:[#allocation11 + $0x78] sm:$0xff]
    %v890 = vld [vmem:[%s17] sm:$0x1]
    %v892 = vlaneseq
    %v893 = vshrl.u32 %v892, 7
    %v894 = vsub.s32 0, %v893
    %v895 = vrot.slane %v890, %v894
    %897 = vmatprep.subr.mxu0 0.0
    %898 = vmatpush1.msra.mxu0 %v874
    %899 = vmatprep.subr.mxu0 0.0
    %900 = vmatpush1.msra.mxu0 %v875
    %901 = vmatprep.subr.mxu0 0.0
    %902 = vmatpush1.msra.mxu0 %v876
    %903 = vmatprep.subr.mxu0 0.0
    %904 = vmatpush1.msra.mxu0 %v877
    %905 = vmatprep.subr.mxu0 0.0
    %906 = vmatpush1.msra.mxu0 %v878
    %907 = vmatprep.subr.mxu0 0.0
    %908 = vmatpush1.msra.mxu0 %v879
    %909 = vmatprep.subr.mxu0 0.0
    %910 = vmatpush1.msra.mxu0 %v880
    %911 = vmatprep.subr.mxu0 0.0
    %912 = vmatpush1.msra.mxu0 %v881
    %913 = vmatprep.subr.mxu0 0.0
    %914 = vmatpush1.msra.mxu0 %v882
    %915 = vmatprep.subr.mxu0 0.0
    %916 = vmatpush1.msra.mxu0 %v883
    %917 = vmatprep.subr.mxu0 0.0
    %918 = vmatpush1.msra.mxu0 %v884
    %919 = vmatprep.subr.mxu0 0.0
    %920 = vmatpush1.msra.mxu0 %v885
    %921 = vmatprep.subr.mxu0 0.0
    %922 = vmatpush1.msra.mxu0 %v886
    %923 = vmatprep.subr.mxu0 0.0
    %924 = vmatpush1.msra.mxu0 %v887
    %925 = vmatprep.subr.mxu0 0.0
    %926 = vmatpush1.msra.mxu0 %v888
    %927 = vmatprep.subr.mxu0 0.0
    %928 = vmatpush1.msra.mxu0 %v889
    %929 = vmatprep.subr.mxu0 0.0
    %930 = vmatpush1.msra.mxu0 0.0
    %931 = vmatprep.subr.mxu0 0.0
    %932 = vmatpush1.msra.mxu0 0.0
    %933 = vmatprep.subr.mxu0 0.0
    %934 = vmatpush1.msra.mxu0 0.0
    %935 = vmatprep.subr.mxu0 0.0
    %936 = vmatpush1.msra.mxu0 0.0
    %937 = vmatprep.subr.mxu0 0.0
    %938 = vmatpush1.msra.mxu0 0.0
    %939 = vmatprep.subr.mxu0 0.0
    %940 = vmatpush1.msra.mxu0 0.0
    %941 = vmatprep.subr.mxu0 0.0
    %942 = vmatpush1.msra.mxu0 0.0
    %943 = vmatprep.subr.mxu0 0.0
    %944 = vmatpush1.msra.mxu0 0.0
    %945 = vmatprep.subr.mxu0 0.0
    %946 = vmatpush1.msra.mxu0 0.0
    %947 = vmatprep.subr.mxu0 0.0
    %948 = vmatpush1.msra.mxu0 0.0
    %949 = vmatprep.subr.mxu0 0.0
    %950 = vmatpush1.msra.mxu0 0.0
    %951 = vmatprep.subr.mxu0 0.0
    %952 = vmatpush1.msra.mxu0 0.0
    %953 = vmatprep.subr.mxu0 0.0
    %954 = vmatpush1.msra.mxu0 0.0
    %955 = vmatprep.subr.mxu0 0.0
    %956 = vmatpush1.msra.mxu0 0.0
    %957 = vmatprep.subr.mxu0 0.0
    %958 = vmatpush1.msra.mxu0 0.0
    %959 = vmatprep.subr.mxu0 0.0
    %960 = vmatpush1.msra.mxu0 0.0
    %961 = vmatprep.mubr.f32.mxu0 0.0
    %962 = vmatmul.mubr.f32.gmra.mrb[0].mxu0 %v873
    %v963 = vpop.f32.mrb[0].mxu0
    %v964 = vadd.f32 %v895, %v963
    %v965 = vpop.f32.mrb[0].mxu0
    %966 = vdwg.mxu0
    %v967 = vmax.f32 %v964, 0.0
    %v968 = vld [vmem:[#allocation13] sm:$0xff]
    %v969 = vld [vmem:[#allocation13 + $0x8] sm:$0xff]
    %v970 = vld [vmem:[#allocation13 + $0x10] sm:$0xff]
    %v971 = vld [vmem:[#allocation13 + $0x18] sm:$0xff]
    %v972 = vld [vmem:[#allocation13 + $0x20] sm:$0xff]
    %v973 = vld [vmem:[#allocation13 + $0x28] sm:$0xff]
    %v974 = vld [vmem:[#allocation13 + $0x30] sm:$0xff]
    %v975 = vld [vmem:[#allocation13 + $0x38] sm:$0xff]
    %v976 = vld [vmem:[#allocation13 + $0x40] sm:$0xff]
    %v977 = vld [vmem:[#allocation13 + $0x48] sm:$0xff]
    %v978 = vld [vmem:[#allocation13 + $0x50] sm:$0xff]
    %v979 = vld [vmem:[#allocation13 + $0x58] sm:$0xff]
    %v980 = vld [vmem:[#allocation13 + $0x60] sm:$0xff]
    %v981 = vld [vmem:[#allocation13 + $0x68] sm:$0xff]
    %v982 = vld [vmem:[#allocation13 + $0x70] sm:$0xff]
    %v983 = vld [vmem:[#allocation13 + $0x78] sm:$0xff]
    %v984 = vld [vmem:[%s19] sm:$0x1]
    %v986 = vlaneseq
    %v987 = vshrl.u32 %v986, 7
    %v988 = vsub.s32 0, %v987
    %v989 = vrot.slane %v984, %v988
    %991 = vmatprep.subr.mxu0 0.0
    %992 = vmatpush1.msra.mxu0 %v968
    %993 = vmatprep.subr.mxu0 0.0
    %994 = vmatpush1.msra.mxu0 %v969
    %995 = vmatprep.subr.mxu0 0.0
    %996 = vmatpush1.msra.mxu0 %v970
    %997 = vmatprep.subr.mxu0 0.0
    %998 = vmatpush1.msra.mxu0 %v971
    %999 = vmatprep.subr.mxu0 0.0
    %1000 = vmatpush1.msra.mxu0 %v972
    %1001 = vmatprep.subr.mxu0 0.0
    %1002 = vmatpush1.msra.mxu0 %v973
    %1003 = vmatprep.subr.mxu0 0.0
    %1004 = vmatpush1.msra.mxu0 %v974
    %1005 = vmatprep.subr.mxu0 0.0
    %1006 = vmatpush1.msra.mxu0 %v975
    %1007 = vmatprep.subr.mxu0 0.0
    %1008 = vmatpush1.msra.mxu0 %v976
    %1009 = vmatprep.subr.mxu0 0.0
    %1010 = vmatpush1.msra.mxu0 %v977
    %1011 = vmatprep.subr.mxu0 0.0
    %1012 = vmatpush1.msra.mxu0 %v978
    %1013 = vmatprep.subr.mxu0 0.0
    %1014 = vmatpush1.msra.mxu0 %v979
    %1015 = vmatprep.subr.mxu0 0.0
    %1016 = vmatpush1.msra.mxu0 %v980
    %1017 = vmatprep.subr.mxu0 0.0
    %1018 = vmatpush1.msra.mxu0 %v981
    %1019 = vmatprep.subr.mxu0 0.0
    %1020 = vmatpush1.msra.mxu0 %v982
    %1021 = vmatprep.subr.mxu0 0.0
    %1022 = vmatpush1.msra.mxu0 %v983
    %1023 = vmatprep.subr.mxu0 0.0
    %1024 = vmatpush1.msra.mxu0 0.0
    %1025 = vmatprep.subr.mxu0 0.0
    %1026 = vmatpush1.msra.mxu0 0.0
    %1027 = vmatprep.subr.mxu0 0.0
    %1028 = vmatpush1.msra.mxu0 0.0
    %1029 = vmatprep.subr.mxu0 0.0
    %1030 = vmatpush1.msra.mxu0 0.0
    %1031 = vmatprep.subr.mxu0 0.0
    %1032 = vmatpush1.msra.mxu0 0.0
    %1033 = vmatprep.subr.mxu0 0.0
    %1034 = vmatpush1.msra.mxu0 0.0
    %1035 = vmatprep.subr.mxu0 0.0
    %1036 = vmatpush1.msra.mxu0 0.0
    %1037 = vmatprep.subr.mxu0 0.0
    %1038 = vmatpush1.msra.mxu0 0.0
    %1039 = vmatprep.subr.mxu0 0.0
    %1040 = vmatpush1.msra.mxu0 0.0
    %1041 = vmatprep.subr.mxu0 0.0
    %1042 = vmatpush1.msra.mxu0 0.0
    %1043 = vmatprep.subr.mxu0 0.0
    %1044 = vmatpush1.msra.mxu0 0.0
    %1045 = vmatprep.subr.mxu0 0.0
    %1046 = vmatpush1.msra.mxu0 0.0
    %1047 = vmatprep.subr.mxu0 0.0
    %1048 = vmatpush1.msra.mxu0 0.0
    %1049 = vmatprep.subr.mxu0 0.0
    %1050 = vmatpush1.msra.mxu0 0.0
    %1051 = vmatprep.subr.mxu0 0.0
    %1052 = vmatpush1.msra.mxu0 0.0
    %1053 = vmatprep.subr.mxu0 0.0
    %1054 = vmatpush1.msra.mxu0 0.0
    %1055 = vmatprep.mubr.f32.mxu0 0.0
    %1056 = vmatmul.mubr.f32.gmra.mrb[0].mxu0 %v967
    %v1057 = vpop.f32.mrb[0].mxu0
    %v1058 = vadd.f32 %v989, %v1057
    %v1059 = vpop.f32.mrb[0].mxu0
    %1060 = vdwg.mxu0
    %1061 = vst [vmem:[#allocation14] sm:$0xff] %v1058
    // Predicated region
    $region110: #{tpu_custom_call.1} parent=1 // pred_check
      _
    $region111: #{tpu_custom_call.1} parent=1 // pred_check_branch
      %1063 = sbr.rel (0) target = $region113
    $region112: #{tpu_custom_call.1} parent=1 // pred_region
      %s1065 = ssub.s32 128, 128
      %1066 = vsyncadd [#allocation4], %s1065
      %s1068 = sshll.u32 [#allocation14], 4
      %s1069 = int_to_ptr.vmem [resolvable:$true] %s1068
      %1071 = dma.vmem_to_hbm [thread:$0]  %s1069, 128, %s20, [#allocation4]
    $region113: #{tpu_custom_call.1} parent=1 // pred_fallthru
      _
    // Predicated region
    $region114: #{tpu_custom_call.1} parent=1 // pred_check
      _
    $region115: #{tpu_custom_call.1} parent=1 // pred_check_branch
      %1073 = sbr.rel (0) target = $region117
    $region116: #{tpu_custom_call.1} parent=1 // pred_region
      %1074 = dma.done [#allocation4], 128
    $region117: #{tpu_custom_call.1} parent=1 // pred_fallthru
      _
    %1075 = vsyncpa [#allocation3], 1
    %1076 = vsyncpa [#allocation6], 1
    %1077 = vsyncpa [#allocation9], 1
    %1078 = vsyncpa [#allocation12], 1
    %1079 = vsyncpa [#allocation4], 1

</llo_original>
